<compile_context>
chip_gen: v7x
topology: tpu7x:2x2x1
jax: 0.10.0
libtpu: 0.0.40
codegen_flags: <defaults>
</compile_context>

<pallas_src>
import math
import jax
import jax.numpy as jnp
from jax.experimental import pallas as pl
from jax.experimental.pallas import tpu as pltpu

EPS = 1e-5       # nn.BatchNorm1d default eps
SLOPE = 0.2      # LeakyReLU negative slope
CIN_PAD = 8      # pad the 3 input channels to 8 for clean sublane handling
COUT_PAD = 128   # lane-dense padding of the 3-wide final output


def _lrelu(x):
    return jnp.where(x > 0, x, SLOPE * x)


def _bn_train_ref(x, gamma, beta):
    # Two-pass training-mode BatchNorm (pure-JAX reference only).
    mean = jnp.mean(x, axis=0, keepdims=True)
    var = jnp.mean((x - mean) ** 2, axis=0, keepdims=True)
    return (x - mean) * jax.lax.rsqrt(var + EPS) * gamma + beta


def make_kernel(batch, npts):
    """Fused pnet (3 pointwise convs + BN + LeakyReLU) + max-pool + mlp kernel."""
    P = batch * npts
    inv_p = 1.0 / P

    def bn(x, gb_ref):
        # Fused training-mode BatchNorm: single pass over x for sum / sum-of-
        # squares, then a per-channel affine apply.  gb_ref rows: [gamma; beta].
        s = jnp.sum(x, axis=0, keepdims=True)
        ss = jnp.sum(x * x, axis=0, keepdims=True)
        mean = s * inv_p
        var = ss * inv_p - mean * mean
        scale = gb_ref[0:1, :] * jax.lax.rsqrt(var + EPS)   # rsqrt -> EUP slot
        shift = gb_ref[1:2, :] - mean * scale
        return x * scale + shift

    def kernel(f_ref,
               w1_ref, gb1_ref,
               w2_ref, gb2_ref,
               w3_ref, gb3_ref,
               w4_ref, b4_ref, w5_ref, b5_ref,
               y_ref):
        x = f_ref[...]                                                  # (P, 8) f32

        # --- pnet --- (conv biases omitted: exactly cancelled by BN mean-sub)
        h = jnp.dot(x.astype(jnp.bfloat16), w1_ref[...],
                    preferred_element_type=jnp.float32)                 # (P, 64)
        h = _lrelu(bn(h, gb1_ref))
        h = jnp.dot(h.astype(jnp.bfloat16), w2_ref[...],
                    preferred_element_type=jnp.float32)                 # (P, 128)
        h = _lrelu(bn(h, gb2_ref))
        h = jnp.dot(h.astype(jnp.bfloat16), w3_ref[...],
                    preferred_element_type=jnp.float32)                 # (P, 1024)
        h = bn(h, gb3_ref)                                              # no act.

        # --- torch.max(x, 2): per-batch max over points (one sublane reduce) ---
        pooled = jnp.max(h.reshape(batch, npts, h.shape[-1]), axis=1)   # (B, 1024)

        # --- mlp: Linear(1024->256) + LeakyReLU(0.2), Linear(256->3, lane-padded)
        m = jnp.dot(pooled.astype(jnp.bfloat16), w4_ref[...],
                    preferred_element_type=jnp.float32) + b4_ref[...]
        m = _lrelu(m)
        y = jnp.dot(m.astype(jnp.bfloat16), w5_ref[...],
                    preferred_element_type=jnp.float32) + b5_ref[...]
        y_ref[...] = y                                                  # (B, 128)

    return kernel


def init_params(key):
    """Deterministic synthetic params mirroring Net.__init__ / _init_layers."""
    ks = jax.random.split(key, 16)

    def conv_w(k, cin, cout):                  # Conv1d weight ~ N(0, 0.02)
        return (0.02 * jax.random.normal(k, (cin, cout))).astype(jnp.float32)

    def conv_b(k, cin, cout):                  # default torch conv bias init
        bound = 1.0 / math.sqrt(cin)
        return jax.random.uniform(k, (1, cout), minval=-bound, maxval=bound,
                                  dtype=jnp.float32)

    def bn(k, c):                              # BN weight ~ N(1, 0.02), bias = 0
        g = (1.0 + 0.02 * jax.random.normal(k, (1, c))).astype(jnp.float32)
        return g, jnp.zeros((1, c), jnp.float32)

    def lin(kw, kb, cin, cout):                # default torch Linear init
        bound = 1.0 / math.sqrt(cin)
        w = jax.random.uniform(kw, (cin, cout), minval=-bound, maxval=bound,
                               dtype=jnp.float32)
        b = jax.random.uniform(kb, (1, cout), minval=-bound, maxval=bound,
                               dtype=jnp.float32)
        return w, b

    p = {}
    # conv1: 3 -> 64 (zero-pad the 3 input channels to CIN_PAD rows)
    w1 = conv_w(ks[0], 3, 64)
    p['w1'] = jnp.concatenate([w1, jnp.zeros((CIN_PAD - 3, 64), jnp.float32)], axis=0)
    p['b1'] = conv_b(ks[1], 3, 64)             # reference only (cancelled by BN)
    p['g1'], p['be1'] = bn(ks[2], 64)
    # conv2: 64 -> 128
    p['w2'] = conv_w(ks[3], 64, 128)
    p['b2'] = conv_b(ks[4], 64, 128)           # reference only
    p['g2'], p['be2'] = bn(ks[5], 128)
    # conv3: 128 -> 1024
    p['w3'] = conv_w(ks[6], 128, 1024)
    p['b3'] = conv_b(ks[7], 128, 1024)         # reference only
    p['g3'], p['be3'] = bn(ks[8], 1024)
    # mlp
    p['w4'], p['b4'] = lin(ks[9], ks[10], 1024, 256)
    p['w5'], p['b5'] = lin(ks[11], ks[12], 256, 3)
    return p


def _kernel_weights(params):
    """bf16 weights, packed (gamma;beta) slabs, lane-padded final layer."""
    bf = lambda w: w.astype(jnp.bfloat16)
    gb = lambda g, b: jnp.concatenate([g, b], axis=0)          # (2, C)
    w5p = jnp.pad(params['w5'], ((0, 0), (0, COUT_PAD - params['w5'].shape[1])))
    b5p = jnp.pad(params['b5'], ((0, 0), (0, COUT_PAD - params['b5'].shape[1])))
    return (bf(params['w1']), gb(params['g1'], params['be1']),
            bf(params['w2']), gb(params['g2'], params['be2']),
            bf(params['w3']), gb(params['g3'], params['be3']),
            bf(params['w4']), params['b4'],
            bf(w5p), b5p)


def _prepare_points(s2d, t2d):
    """f = cat([(s2d/s).T, (t2d/s).T], dim=2) flattened to [B*(Ns+Nt), CIN_PAD]."""
    B, Ns, _ = s2d.shape
    Nt = t2d.shape[1]
    scale = jnp.array([112.0, 112.0, 1.0], dtype=jnp.float32)   # s[:, :, :2] *= 112
    f = jnp.concatenate([s2d / scale, t2d / scale], axis=1)      # (B, Ns+Nt, 3)
    npts = Ns + Nt
    f2 = f.reshape(B * npts, 3).astype(jnp.float32)
    f2 = jnp.pad(f2, ((0, 0), (0, CIN_PAD - 3)))                 # (P, CIN_PAD)
    return f2, B, npts


def net_forward(s2d, t2d, params):
    f2, B, npts = _prepare_points(s2d, t2d)
    P = B * npts
    args = (f2,) + _kernel_weights(params)

    flops = (2 * P * (CIN_PAD * 64 + 64 * 128 + 128 * 1024)
             + 2 * B * (1024 * 256 + 256 * COUT_PAD))
    bytes_accessed = sum(int(a.size) * a.dtype.itemsize for a in args) + B * COUT_PAD * 4

    # TODO(synk): before scaling npts into the thousands, add a points-axis grid
    # (accumulate per-channel sum/sum-of-squares for BN, normalize + pool in a
    # second pass) so activations stream through VMEM (v7x: 32 MiB scoped) and
    # the grid can be marked "parallel" for the second v7x TensorCore.
    vmem = pl.BlockSpec(memory_space=pltpu.MemorySpace.VMEM)
    y = pl.pallas_call(
        make_kernel(B, npts),
        out_shape=jax.ShapeDtypeStruct((B, COUT_PAD), jnp.float32),
        in_specs=[vmem] * len(args),
        out_specs=vmem,
        cost_estimate=pl.CostEstimate(flops=flops,
                                      transcendentals=64 + 128 + 1024,
                                      bytes_accessed=bytes_accessed),
    )(*args)
    y = y[:, :3]                                                 # lane-dense -> (B, 3)

    # v2a: tiny [B,3] -> [B,2] angle conversion, done in plain JAX glue
    # (acos / atan2 transcendental lowering is not guaranteed in Mosaic).
    r = jnp.sqrt(jnp.sum(y ** 2, axis=1))
    theta = jnp.arccos(y[:, 2] / r) / math.pi
    phi = (jnp.arctan2(y[:, 1], y[:, 0]) + math.pi) / (2.0 * math.pi)
    rt = jnp.stack([theta, phi], axis=1)
    return {'vec': y, 'y': rt}


def ref_vec(s2d, t2d, params):
    """Pure-JAX reference for the 'vec' output (module math incl. conv biases)."""
    f2, B, npts = _prepare_points(s2d, t2d)
    q = lambda n: params[n].astype(jnp.bfloat16).astype(jnp.float32)  # same quantized weights
    h = f2 @ q('w1') + params['b1']
    h = _lrelu(_bn_train_ref(h, params['g1'], params['be1']))
    h = h @ q('w2') + params['b2']
    h = _lrelu(_bn_train_ref(h, params['g2'], params['be2']))
    h = h @ q('w3') + params['b3']
    h = _bn_train_ref(h, params['g3'], params['be3'])
    pooled = jnp.max(h.reshape(B, npts, -1), axis=1)
    m = _lrelu(pooled @ q('w4') + params['b4'])
    return m @ q('w5') + params['b5']


if __name__ == "__main__":
    key = jax.random.PRNGKey(0)
    k_param, k_s, k_t = jax.random.split(key, 3)

    params = init_params(k_param)

    # input is a list; only input[1] (s2d) and input[3] (t2d) are used: [B, N, 3] landmarks.
    B, Ns, Nt = 2, 8, 8
    s2d = jax.random.uniform(k_s, (B, Ns, 3), minval=-112.0, maxval=112.0,
                             dtype=jnp.float32)
    t2d = jax.random.uniform(k_t, (B, Nt, 3), minval=-112.0, maxval=112.0,
                             dtype=jnp.float32)

    out = net_forward(s2d, t2d, params)
    jax.block_until_ready(out)

    ref = ref_vec(s2d, t2d, params)
    if not jnp.allclose(out['vec'], ref, rtol=2e-2, atol=2e-2):
        raise AssertionError("Pallas kernel output mismatch vs JAX reference")
    assert out['vec'].shape == (B, 3) and out['y'].shape == (B, 2)
    assert bool(jnp.all(jnp.isfinite(out['vec']))) and bool(jnp.all(jnp.isfinite(out['y'])))

    print("KERNEL_OK")
</pallas_src>

<mosaic_0001>
module attributes {stable_mosaic.version = 11 : i64} {
  func.func @kernel(%arg0: memref<32x8xf32, #tpu.memory_space<vmem>>, %arg1: memref<8x64xbf16, #tpu.memory_space<vmem>>, %arg2: memref<2x64xf32, #tpu.memory_space<vmem>>, %arg3: memref<64x128xbf16, #tpu.memory_space<vmem>>, %arg4: memref<2x128xf32, #tpu.memory_space<vmem>>, %arg5: memref<128x1024xbf16, #tpu.memory_space<vmem>>, %arg6: memref<2x1024xf32, #tpu.memory_space<vmem>>, %arg7: memref<1024x256xbf16, #tpu.memory_space<vmem>>, %arg8: memref<1x256xf32, #tpu.memory_space<vmem>>, %arg9: memref<256x128xbf16, #tpu.memory_space<vmem>>, %arg10: memref<1x128xf32, #tpu.memory_space<vmem>>, %arg11: memref<2x128xf32, #tpu.memory_space<vmem>>) attributes {dimension_semantics = [], scalar_prefetch = 0 : i64, scratch_operands = 0 : i64, tpu.core_type = #tpu.core_type<tc>} {
    %c0 = arith.constant 0 : index
    %c0_0 = arith.constant 0 : index
    %0 = vector.load %arg0[%c0, %c0_0] : memref<32x8xf32, #tpu.memory_space<vmem>>, vector<32x8xf32>
    %1 = arith.truncf %0 : vector<32x8xf32> to vector<32x8xbf16>
    %c0_1 = arith.constant 0 : index
    %c0_2 = arith.constant 0 : index
    %2 = vector.load %arg1[%c0_1, %c0_2] : memref<8x64xbf16, #tpu.memory_space<vmem>>, vector<8x64xbf16>
    %cst = arith.constant dense<0.000000e+00> : vector<32x64xf32>
    %3 = tpu.matmul %1, %2, %cst {dimension_numbers = #tpu.dot_dimension_numbers<[1], [0], [0], [1], [0, 0, 1, 1], [], []>} : vector<32x8xbf16>, vector<8x64xbf16>, vector<32x64xf32> -> vector<32x64xf32>
    %cst_3 = arith.constant dense<0.000000e+00> : vector<64xf32>
    %4 = vector.multi_reduction <add>, %3, %cst_3 [0] : vector<32x64xf32> to vector<64xf32>
    %5 = vector.shape_cast %4 : vector<64xf32> to vector<1x64xf32>
    %6 = arith.mulf %3, %3 : vector<32x64xf32>
    %cst_4 = arith.constant dense<0.000000e+00> : vector<64xf32>
    %7 = vector.multi_reduction <add>, %6, %cst_4 [0] : vector<32x64xf32> to vector<64xf32>
    %8 = vector.shape_cast %7 : vector<64xf32> to vector<1x64xf32>
    %cst_5 = arith.constant 3.125000e-02 : f32
    %9 = vector.broadcast %cst_5 : f32 to vector<1x64xf32>
    %10 = arith.mulf %5, %9 : vector<1x64xf32>
    %cst_6 = arith.constant 3.125000e-02 : f32
    %11 = vector.broadcast %cst_6 : f32 to vector<1x64xf32>
    %12 = arith.mulf %8, %11 : vector<1x64xf32>
    %13 = arith.mulf %10, %10 : vector<1x64xf32>
    %14 = arith.subf %12, %13 : vector<1x64xf32>
    %c0_7 = arith.constant 0 : index
    %c0_8 = arith.constant 0 : index
    %15 = vector.load %arg2[%c0_7, %c0_8] : memref<2x64xf32, #tpu.memory_space<vmem>>, vector<1x64xf32>
    %cst_9 = arith.constant 9.99999974E-6 : f32
    %16 = vector.broadcast %cst_9 : f32 to vector<1x64xf32>
    %17 = arith.addf %14, %16 : vector<1x64xf32>
    %18 = math.rsqrt %17 : vector<1x64xf32>
    %19 = arith.mulf %15, %18 : vector<1x64xf32>
    %c1 = arith.constant 1 : index
    %c0_10 = arith.constant 0 : index
    %20 = vector.load %arg2[%c1, %c0_10] : memref<2x64xf32, #tpu.memory_space<vmem>>, vector<1x64xf32>
    %21 = arith.mulf %10, %19 : vector<1x64xf32>
    %22 = arith.subf %20, %21 : vector<1x64xf32>
    %23 = vector.broadcast %19 : vector<1x64xf32> to vector<32x64xf32>
    %24 = arith.mulf %3, %23 : vector<32x64xf32>
    %25 = vector.broadcast %22 : vector<1x64xf32> to vector<32x64xf32>
    %26 = arith.addf %24, %25 : vector<32x64xf32>
    %cst_11 = arith.constant 0.000000e+00 : f32
    %27 = vector.broadcast %cst_11 : f32 to vector<32x64xf32>
    %28 = arith.cmpf ogt, %26, %27 : vector<32x64xf32>
    %cst_12 = arith.constant 2.000000e-01 : f32
    %29 = vector.broadcast %cst_12 : f32 to vector<32x64xf32>
    %30 = arith.mulf %29, %26 : vector<32x64xf32>
    %31 = arith.select %28, %26, %30 : vector<32x64xi1>, vector<32x64xf32>
    %32 = arith.truncf %31 : vector<32x64xf32> to vector<32x64xbf16>
    %c0_13 = arith.constant 0 : index
    %c0_14 = arith.constant 0 : index
    %33 = vector.load %arg3[%c0_13, %c0_14] : memref<64x128xbf16, #tpu.memory_space<vmem>>, vector<64x128xbf16>
    %cst_15 = arith.constant dense<0.000000e+00> : vector<32x128xf32>
    %34 = tpu.matmul %32, %33, %cst_15 {dimension_numbers = #tpu.dot_dimension_numbers<[1], [0], [0], [1], [0, 0, 1, 1], [], []>} : vector<32x64xbf16>, vector<64x128xbf16>, vector<32x128xf32> -> vector<32x128xf32>
    %cst_16 = arith.constant dense<0.000000e+00> : vector<128xf32>
    %35 = vector.multi_reduction <add>, %34, %cst_16 [0] : vector<32x128xf32> to vector<128xf32>
    %36 = vector.shape_cast %35 : vector<128xf32> to vector<1x128xf32>
    %37 = arith.mulf %34, %34 : vector<32x128xf32>
    %cst_17 = arith.constant dense<0.000000e+00> : vector<128xf32>
    %38 = vector.multi_reduction <add>, %37, %cst_17 [0] : vector<32x128xf32> to vector<128xf32>
    %39 = vector.shape_cast %38 : vector<128xf32> to vector<1x128xf32>
    %cst_18 = arith.constant 3.125000e-02 : f32
    %40 = vector.broadcast %cst_18 : f32 to vector<1x128xf32>
    %41 = arith.mulf %36, %40 : vector<1x128xf32>
    %cst_19 = arith.constant 3.125000e-02 : f32
    %42 = vector.broadcast %cst_19 : f32 to vector<1x128xf32>
    %43 = arith.mulf %39, %42 : vector<1x128xf32>
    %44 = arith.mulf %41, %41 : vector<1x128xf32>
    %45 = arith.subf %43, %44 : vector<1x128xf32>
    %c0_20 = arith.constant 0 : index
    %c0_21 = arith.constant 0 : index
    %46 = vector.load %arg4[%c0_20, %c0_21] : memref<2x128xf32, #tpu.memory_space<vmem>>, vector<1x128xf32>
    %cst_22 = arith.constant 9.99999974E-6 : f32
    %47 = vector.broadcast %cst_22 : f32 to vector<1x128xf32>
    %48 = arith.addf %45, %47 : vector<1x128xf32>
    %49 = math.rsqrt %48 : vector<1x128xf32>
    %50 = arith.mulf %46, %49 : vector<1x128xf32>
    %c1_23 = arith.constant 1 : index
    %c0_24 = arith.constant 0 : index
    %51 = vector.load %arg4[%c1_23, %c0_24] : memref<2x128xf32, #tpu.memory_space<vmem>>, vector<1x128xf32>
    %52 = arith.mulf %41, %50 : vector<1x128xf32>
    %53 = arith.subf %51, %52 : vector<1x128xf32>
    %54 = vector.broadcast %50 : vector<1x128xf32> to vector<32x128xf32>
    %55 = arith.mulf %34, %54 : vector<32x128xf32>
    %56 = vector.broadcast %53 : vector<1x128xf32> to vector<32x128xf32>
    %57 = arith.addf %55, %56 : vector<32x128xf32>
    %cst_25 = arith.constant 0.000000e+00 : f32
    %58 = vector.broadcast %cst_25 : f32 to vector<32x128xf32>
    %59 = arith.cmpf ogt, %57, %58 : vector<32x128xf32>
    %cst_26 = arith.constant 2.000000e-01 : f32
    %60 = vector.broadcast %cst_26 : f32 to vector<32x128xf32>
    %61 = arith.mulf %60, %57 : vector<32x128xf32>
    %62 = arith.select %59, %57, %61 : vector<32x128xi1>, vector<32x128xf32>
    %63 = arith.truncf %62 : vector<32x128xf32> to vector<32x128xbf16>
    %c0_27 = arith.constant 0 : index
    %c0_28 = arith.constant 0 : index
    %64 = vector.load %arg5[%c0_27, %c0_28] : memref<128x1024xbf16, #tpu.memory_space<vmem>>, vector<128x1024xbf16>
    %cst_29 = arith.constant dense<0.000000e+00> : vector<32x1024xf32>
    %65 = tpu.matmul %63, %64, %cst_29 {dimension_numbers = #tpu.dot_dimension_numbers<[1], [0], [0], [1], [0, 0, 1, 1], [], []>} : vector<32x128xbf16>, vector<128x1024xbf16>, vector<32x1024xf32> -> vector<32x1024xf32>
    %cst_30 = arith.constant dense<0.000000e+00> : vector<1024xf32>
    %66 = vector.multi_reduction <add>, %65, %cst_30 [0] : vector<32x1024xf32> to vector<1024xf32>
    %67 = vector.shape_cast %66 : vector<1024xf32> to vector<1x1024xf32>
    %68 = arith.mulf %65, %65 : vector<32x1024xf32>
    %cst_31 = arith.constant dense<0.000000e+00> : vector<1024xf32>
    %69 = vector.multi_reduction <add>, %68, %cst_31 [0] : vector<32x1024xf32> to vector<1024xf32>
    %70 = vector.shape_cast %69 : vector<1024xf32> to vector<1x1024xf32>
    %cst_32 = arith.constant 3.125000e-02 : f32
    %71 = vector.broadcast %cst_32 : f32 to vector<1x1024xf32>
    %72 = arith.mulf %67, %71 : vector<1x1024xf32>
    %cst_33 = arith.constant 3.125000e-02 : f32
    %73 = vector.broadcast %cst_33 : f32 to vector<1x1024xf32>
    %74 = arith.mulf %70, %73 : vector<1x1024xf32>
    %75 = arith.mulf %72, %72 : vector<1x1024xf32>
    %76 = arith.subf %74, %75 : vector<1x1024xf32>
    %c0_34 = arith.constant 0 : index
    %c0_35 = arith.constant 0 : index
    %77 = vector.load %arg6[%c0_34, %c0_35] : memref<2x1024xf32, #tpu.memory_space<vmem>>, vector<1x1024xf32>
    %cst_36 = arith.constant 9.99999974E-6 : f32
    %78 = vector.broadcast %cst_36 : f32 to vector<1x1024xf32>
    %79 = arith.addf %76, %78 : vector<1x1024xf32>
    %80 = math.rsqrt %79 : vector<1x1024xf32>
    %81 = arith.mulf %77, %80 : vector<1x1024xf32>
    %c1_37 = arith.constant 1 : index
    %c0_38 = arith.constant 0 : index
    %82 = vector.load %arg6[%c1_37, %c0_38] : memref<2x1024xf32, #tpu.memory_space<vmem>>, vector<1x1024xf32>
    %83 = arith.mulf %72, %81 : vector<1x1024xf32>
    %84 = arith.subf %82, %83 : vector<1x1024xf32>
    %85 = vector.broadcast %81 : vector<1x1024xf32> to vector<32x1024xf32>
    %86 = arith.mulf %65, %85 : vector<32x1024xf32>
    %87 = vector.broadcast %84 : vector<1x1024xf32> to vector<32x1024xf32>
    %88 = arith.addf %86, %87 : vector<32x1024xf32>
    %89 = vector.shape_cast %88 : vector<32x1024xf32> to vector<2x16x1024xf32>
    %cst_39 = arith.constant dense<0xFF800000> : vector<2x1024xf32>
    %90 = vector.multi_reduction <maximumf>, %89, %cst_39 [1] : vector<2x16x1024xf32> to vector<2x1024xf32>
    %91 = arith.truncf %90 : vector<2x1024xf32> to vector<2x1024xbf16>
    %c0_40 = arith.constant 0 : index
    %c0_41 = arith.constant 0 : index
    %92 = vector.load %arg7[%c0_40, %c0_41] : memref<1024x256xbf16, #tpu.memory_space<vmem>>, vector<1024x256xbf16>
    %cst_42 = arith.constant dense<0.000000e+00> : vector<2x256xf32>
    %93 = tpu.matmul %91, %92, %cst_42 {dimension_numbers = #tpu.dot_dimension_numbers<[1], [0], [0], [1], [0, 0, 1, 1], [], []>} : vector<2x1024xbf16>, vector<1024x256xbf16>, vector<2x256xf32> -> vector<2x256xf32>
    %c0_43 = arith.constant 0 : index
    %c0_44 = arith.constant 0 : index
    %94 = vector.load %arg8[%c0_43, %c0_44] : memref<1x256xf32, #tpu.memory_space<vmem>>, vector<1x256xf32>
    %95 = vector.broadcast %94 : vector<1x256xf32> to vector<2x256xf32>
    %96 = arith.addf %93, %95 : vector<2x256xf32>
    %cst_45 = arith.constant 0.000000e+00 : f32
    %97 = vector.broadcast %cst_45 : f32 to vector<2x256xf32>
    %98 = arith.cmpf ogt, %96, %97 : vector<2x256xf32>
    %cst_46 = arith.constant 2.000000e-01 : f32
    %99 = vector.broadcast %cst_46 : f32 to vector<2x256xf32>
    %100 = arith.mulf %99, %96 : vector<2x256xf32>
    %101 = arith.select %98, %96, %100 : vector<2x256xi1>, vector<2x256xf32>
    %102 = arith.truncf %101 : vector<2x256xf32> to vector<2x256xbf16>
    %c0_47 = arith.constant 0 : index
    %c0_48 = arith.constant 0 : index
    %103 = vector.load %arg9[%c0_47, %c0_48] : memref<256x128xbf16, #tpu.memory_space<vmem>>, vector<256x128xbf16>
    %cst_49 = arith.constant dense<0.000000e+00> : vector<2x128xf32>
    %104 = tpu.matmul %102, %103, %cst_49 {dimension_numbers = #tpu.dot_dimension_numbers<[1], [0], [0], [1], [0, 0, 1, 1], [], []>} : vector<2x256xbf16>, vector<256x128xbf16>, vector<2x128xf32> -> vector<2x128xf32>
    %c0_50 = arith.constant 0 : index
    %c0_51 = arith.constant 0 : index
    %105 = vector.load %arg10[%c0_50, %c0_51] : memref<1x128xf32, #tpu.memory_space<vmem>>, vector<1x128xf32>
    %106 = vector.broadcast %105 : vector<1x128xf32> to vector<2x128xf32>
    %107 = arith.addf %104, %106 : vector<2x128xf32>
    %c0_52 = arith.constant 0 : index
    %c0_53 = arith.constant 0 : index
    %108 = vector.load %arg11[%c0_52, %c0_53] : memref<2x128xf32, #tpu.memory_space<vmem>>, vector<2x128xf32>
    tpu.vector_store %arg11[%c0_52, %c0_53], %107 {strides = array<i32>} : memref<2x128xf32, #tpu.memory_space<vmem>>, vector<2x128xf32>,
    return
  }
}

</mosaic_0001>

<llo_original>
// kernel: tpu_custom_call.1
$region0: #{tpu_custom_call.1}
  #allocation0 [shape = 'u32[]', space=smem, size = 0x4, offset = 0x4, fixed_abs, tag = 'smem constant byte address 0x4 - core index']
  #allocation1 [shape = 'u32[144,128]{1,0:T(1,128)}', space=vmem, size = 0x12000, scoped, tag = 'internal scratch']
  %s0 = inlined_call_operand.vmem [shape: f32[32,8], index: 0, kind: input, shape index: {}]
  %s1 = inlined_call_operand.hbm [shape: bf16[8,64], index: 1, kind: input, shape index: {}]
  %s2 = inlined_call_operand.vmem [shape: f32[2,64], index: 2, kind: input, shape index: {}]
  %s3 = inlined_call_operand.vmem [shape: bf16[64,128], index: 3, kind: input, shape index: {}]
  %s4 = inlined_call_operand.vmem [shape: f32[2,128], index: 4, kind: input, shape index: {}]
  %s5 = inlined_call_operand.hbm [shape: bf16[128,1024], index: 5, kind: input, shape index: {}]
  %s6 = inlined_call_operand.vmem [shape: f32[2,1024], index: 6, kind: input, shape index: {}]
  %s7 = inlined_call_operand.hbm [shape: bf16[1024,256], index: 7, kind: input, shape index: {}]
  %s8 = inlined_call_operand.vmem [shape: f32[1,256], index: 8, kind: input, shape index: {}]
  %s9 = inlined_call_operand.hbm [shape: bf16[256,128], index: 9, kind: input, shape index: {}]
  %s10 = inlined_call_operand.vmem [shape: f32[1,128], index: 10, kind: input, shape index: {}]
  %s11 = inlined_call_operand.hbm [shape: f32[2,128], index: 11, kind: output, shape index: {}]
  %s12 = sld [smem:[#allocation0]]
  $region70: #{tpu_custom_call.1} parent=0
    _
  %s14 = ssub.s32 1, %s12
  %s15 = scalar_select 0, %s14, %s12
  $region1: #{tpu_custom_call.1} parent=0
    #allocation2 [shape = 'u8[2048]{0}', space=vmem, size = 0x800, scoped, tag = 'input window, operand 1, single buffered']
    #allocation3 [shape = 's32[1]{0}', space=sflag, size = 0x4, scoped, tag = 'scoped memory for tpu_custom_call.1']
    #allocation4 [shape = 's32[1]{0}', space=sflag, size = 0x4, scoped, tag = 'scoped memory for tpu_custom_call.1']
    #allocation5 [shape = 'u8[262144]{0}', space=vmem, size = 0x40000, scoped, tag = 'input window, operand 5, single buffered']
    #allocation6 [shape = 's32[1]{0}', space=sflag, size = 0x4, scoped, tag = 'scoped memory for tpu_custom_call.1']
    #allocation7 [shape = 'u8[524288]{0}', space=vmem, size = 0x80000, scoped, tag = 'input window, operand 7, single buffered']
    #allocation8 [shape = 'u8[65536]{0}', space=vmem, size = 0x10000, scoped, tag = 'input window, operand 9, single buffered']
    #allocation9 [shape = 's32[1]{0}', space=sflag, size = 0x4, scoped, tag = 'scoped memory for tpu_custom_call.1']
    #allocation10 [shape = 'u8[1024]{0}', space=vmem, size = 0x400, scoped, tag = 'output window, operand 0, single buffered']
    %16 = vsyncpa [#allocation3], 0
    %17 = vsyncpa [#allocation6], 0
    %18 = vsyncpa [#allocation9], 0
    %19 = vsyncpa [#allocation4], 0
    // Predicated region
    $region2: #{tpu_custom_call.1} parent=1 // pred_check
      _
    $region3: #{tpu_custom_call.1} parent=1 // pred_check_branch
      %21 = sbr.rel (0) target = $region5
    $region4: #{tpu_custom_call.1} parent=1 // pred_region
      _
    $region5: #{tpu_custom_call.1} parent=1 // pred_fallthru
      _
    // Predicated region
    $region6: #{tpu_custom_call.1} parent=1 // pred_check
      _
    $region7: #{tpu_custom_call.1} parent=1 // pred_check_branch
      %23 = sbr.rel (0) target = $region9
    $region8: #{tpu_custom_call.1} parent=1 // pred_region
      %s25 = ssub.s32 64, 64
      %26 = vsyncadd [#allocation3], %s25
      %s28 = sshll.u32 [#allocation2], 4
      %s29 = int_to_ptr.vmem [resolvable:$true] %s28
      %31 = dma.hbm_to_vmem [thread:$0]  %s1, 64, %s29, [#allocation3]
    $region9: #{tpu_custom_call.1} parent=1 // pred_fallthru
      _
    // Predicated region
    $region10: #{tpu_custom_call.1} parent=1 // pred_check
      _
    $region11: #{tpu_custom_call.1} parent=1 // pred_check_branch
      %33 = sbr.rel (0) target = $region13
    $region12: #{tpu_custom_call.1} parent=1 // pred_region
      _
    $region13: #{tpu_custom_call.1} parent=1 // pred_fallthru
      _
    // Predicated region
    $region14: #{tpu_custom_call.1} parent=1 // pred_check
      _
    $region15: #{tpu_custom_call.1} parent=1 // pred_check_branch
      %35 = sbr.rel (0) target = $region17
    $region16: #{tpu_custom_call.1} parent=1 // pred_region
      _
    $region17: #{tpu_custom_call.1} parent=1 // pred_fallthru
      _
    // Predicated region
    $region18: #{tpu_custom_call.1} parent=1 // pred_check
      _
    $region19: #{tpu_custom_call.1} parent=1 // pred_check_branch
      %37 = sbr.rel (0) target = $region21
    $region20: #{tpu_custom_call.1} parent=1 // pred_region
      _
    $region21: #{tpu_custom_call.1} parent=1 // pred_fallthru
      _
    // Predicated region
    $region22: #{tpu_custom_call.1} parent=1 // pred_check
      _
    $region23: #{tpu_custom_call.1} parent=1 // pred_check_branch
      %39 = sbr.rel (0) target = $region25
    $region24: #{tpu_custom_call.1} parent=1 // pred_region
      %s41 = ssub.s32 8192, 8192
      %42 = vsyncadd [#allocation6], %s41
      %s43 = sshll.u32 [#allocation5], 4
      %s44 = int_to_ptr.vmem [resolvable:$true] %s43
      %49 = dma.hbm_to_vmem [thread:$0]  %s5, 8192, %s44, [#allocation6], 512, 512, 32
    $region25: #{tpu_custom_call.1} parent=1 // pred_fallthru
      _
    // Predicated region
    $region26: #{tpu_custom_call.1} parent=1 // pred_check
      _
    $region27: #{tpu_custom_call.1} parent=1 // pred_check_branch
      %51 = sbr.rel (0) target = $region29
    $region28: #{tpu_custom_call.1} parent=1 // pred_region
      _
    $region29: #{tpu_custom_call.1} parent=1 // pred_fallthru
      _
    // Predicated region
    $region30: #{tpu_custom_call.1} parent=1 // pred_check
      _
    $region31: #{tpu_custom_call.1} parent=1 // pred_check_branch
      %53 = sbr.rel (0) target = $region33
    $region32: #{tpu_custom_call.1} parent=1 // pred_region
      %s55 = ssub.s32 16384, 16384
      %56 = vsyncadd [#allocation6], %s55
      %s57 = sshll.u32 [#allocation7], 4
      %s58 = int_to_ptr.vmem [resolvable:$true] %s57
      %63 = dma.hbm_to_vmem [thread:$0]  %s7, 16384, %s58, [#allocation6], 128, 128, 8
    $region33: #{tpu_custom_call.1} parent=1 // pred_fallthru
      _
    // Predicated region
    $region34: #{tpu_custom_call.1} parent=1 // pred_check
      _
    $region35: #{tpu_custom_call.1} parent=1 // pred_check_branch
      %65 = sbr.rel (0) target = $region37
    $region36: #{tpu_custom_call.1} parent=1 // pred_region
      _
    $region37: #{tpu_custom_call.1} parent=1 // pred_fallthru
      _
    // Predicated region
    $region38: #{tpu_custom_call.1} parent=1 // pred_check
      _
    $region39: #{tpu_custom_call.1} parent=1 // pred_check_branch
      %67 = sbr.rel (0) target = $region41
    $region40: #{tpu_custom_call.1} parent=1 // pred_region
      %s69 = ssub.s32 2048, 2048
      %70 = vsyncadd [#allocation9], %s69
      %s71 = sshll.u32 [#allocation8], 4
      %s72 = int_to_ptr.vmem [resolvable:$true] %s71
      %77 = dma.hbm_to_vmem [thread:$0]  %s9, 2048, %s72, [#allocation9], 64, 64, 4
    $region41: #{tpu_custom_call.1} parent=1 // pred_fallthru
      _
    // Predicated region
    $region42: #{tpu_custom_call.1} parent=1 // pred_check
      _
    $region43: #{tpu_custom_call.1} parent=1 // pred_check_branch
      %79 = sbr.rel (0) target = $region45
    $region44: #{tpu_custom_call.1} parent=1 // pred_region
      _
    $region45: #{tpu_custom_call.1} parent=1 // pred_fallthru
      _
    // Predicated region
    $region46: #{tpu_custom_call.1} parent=1 // pred_check
      _
    $region47: #{tpu_custom_call.1} parent=1 // pred_check_branch
      %81 = sbr.rel (0) target = $region49
    $region48: #{tpu_custom_call.1} parent=1 // pred_region
      %82 = dma.done [#allocation3], 64
    $region49: #{tpu_custom_call.1} parent=1 // pred_fallthru
      _
    // Predicated region
    $region50: #{tpu_custom_call.1} parent=1 // pred_check
      _
    $region51: #{tpu_custom_call.1} parent=1 // pred_check_branch
      %84 = sbr.rel (0) target = $region53
    $region52: #{tpu_custom_call.1} parent=1 // pred_region
      %85 = dma.done [#allocation6], 8192
    $region53: #{tpu_custom_call.1} parent=1 // pred_fallthru
      _
    // Predicated region
    $region54: #{tpu_custom_call.1} parent=1 // pred_check
      _
    $region55: #{tpu_custom_call.1} parent=1 // pred_check_branch
      %87 = sbr.rel (0) target = $region57
    $region56: #{tpu_custom_call.1} parent=1 // pred_region
      %88 = dma.done [#allocation6], 16384
    $region57: #{tpu_custom_call.1} parent=1 // pred_fallthru
      _
    // Predicated region
    $region58: #{tpu_custom_call.1} parent=1 // pred_check
      _
    $region59: #{tpu_custom_call.1} parent=1 // pred_check_branch
      %90 = sbr.rel (0) target = $region61
    $region60: #{tpu_custom_call.1} parent=1 // pred_region
      %91 = dma.done [#allocation9], 2048
    $region61: #{tpu_custom_call.1} parent=1 // pred_fallthru
      _
    %v93 = vld [vmem:[%s0] sm:$0xff]
    %v94 = vld [vmem:[%s0 + $0x8] sm:$0xff]
    %v95 = vld [vmem:[%s0 + $0x10] sm:$0xff]
    %v96 = vld [vmem:[%s0 + $0x18] sm:$0xff]
    %v97 = vpack.c.bf16 %v94, %v93
    %v98 = vpack.c.bf16 %v96, %v95
    %v99 = vld [vmem:[#allocation2] sm:$0xf]
    %vm100 = vcmask 64512
    %v102 = vsel %vm100, %v97, 0
    %v105 = vsel %vm100, %v98, 0
    %vm107 = vcmask 1043456
    %v109 = vsel %vm107, %v99, 0
    %111 = vmatprep.subr.bf16.mxu0 0
    %112 = vmatpush1.bf16.msra.mxu0 %v109
    %113 = vmatprep.subr.bf16.mxu0 0
    %114 = vmatpush1.bf16.msra.mxu0 0
    %115 = vmatprep.subr.bf16.mxu0 0
    %116 = vmatpush1.bf16.msra.mxu0 0
    %117 = vmatprep.subr.bf16.mxu0 0
    %118 = vmatpush1.bf16.msra.mxu0 0
    %119 = vmatprep.subr.bf16.mxu0 0
    %120 = vmatpush1.bf16.msra.mxu0 0
    %121 = vmatprep.subr.bf16.mxu0 0
    %122 = vmatpush1.bf16.msra.mxu0 0
    %123 = vmatprep.subr.bf16.mxu0 0
    %124 = vmatpush1.bf16.msra.mxu0 0
    %125 = vmatprep.subr.bf16.mxu0 0
    %126 = vmatpush1.bf16.msra.mxu0 0
    %127 = vmatprep.subr.bf16.mxu0 0
    %128 = vmatpush1.bf16.msra.mxu0 0
    %129 = vmatprep.subr.bf16.mxu0 0
    %130 = vmatpush1.bf16.msra.mxu0 0
    %131 = vmatprep.subr.bf16.mxu0 0
    %132 = vmatpush1.bf16.msra.mxu0 0
    %133 = vmatprep.subr.bf16.mxu0 0
    %134 = vmatpush1.bf16.msra.mxu0 0
    %135 = vmatprep.subr.bf16.mxu0 0
    %136 = vmatpush1.bf16.msra.mxu0 0
    %137 = vmatprep.subr.bf16.mxu0 0
    %138 = vmatpush1.bf16.msra.mxu0 0
    %139 = vmatprep.subr.bf16.mxu0 0
    %140 = vmatpush1.bf16.msra.mxu0 0
    %141 = vmatprep.subr.bf16.mxu0 0
    %142 = vmatpush1.bf16.msra.mxu0 0
    %143 = vmatprep.mubr.bf16.mxu0 0
    %144 = vmatmul.mubr.bf16.gmra.mrb[0].mxu0 %v102
    %v145 = vpop.f32.mrb[0].mxu0
    %v146 = vadd.f32 0.0, %v145
    %v147 = vpop.f32.mrb[0].mxu0
    %v148 = vpop.f32.mrb[0].mxu0
    %v149 = vadd.f32 0.0, %v148
    %v150 = vpop.f32.mrb[0].mxu0
    %151 = vmatprep.mubr.bf16.mxu0 0
    %152 = vmatmul.mubr.bf16.gmra.mrb[0].mxu0 %v105
    %v153 = vpop.f32.mrb[0].mxu0
    %v154 = vadd.f32 0.0, %v153
    %v155 = vpop.f32.mrb[0].mxu0
    %v156 = vpop.f32.mrb[0].mxu0
    %v157 = vadd.f32 0.0, %v156
    %v158 = vpop.f32.mrb[0].mxu0
    %159 = vdwg.mxu0
    %vm160 = vcmask 523264
    %v161 = vsel %vm160, %v146, 0.0
    %v162 = vsel %vm160, %v149, 0.0
    %v163 = vadd.f32 %v161, %v162
    %v164 = vsel %vm160, %v154, 0.0
    %v165 = vadd.f32 %v163, %v164
    %v166 = vsel %vm160, %v157, 0.0
    %v167 = vadd.f32 %v165, %v166
    %v168 = vrot.slane %v167, 4
    %v169 = vadd.f32 %v167, %v168
    %v170 = vrot.slane %v169, 2
    %v171 = vadd.f32 %v169, %v170
    %v172 = vrot.slane %v171, 1
    %v173 = vadd.f32 %v171, %v172
    %v174 = vmul.f32 %v146, %v146
    %v175 = vmul.f32 %v149, %v149
    %v176 = vmul.f32 %v154, %v154
    %v177 = vmul.f32 %v157, %v157
    %v178 = vsel %vm160, %v174, 0.0
    %v179 = vsel %vm160, %v175, 0.0
    %v180 = vadd.f32 %v178, %v179
    %v181 = vsel %vm160, %v176, 0.0
    %v182 = vadd.f32 %v180, %v181
    %v183 = vsel %vm160, %v177, 0.0
    %v184 = vadd.f32 %v182, %v183
    %v185 = vrot.slane %v184, 4
    %v186 = vadd.f32 %v184, %v185
    %v187 = vrot.slane %v186, 2
    %v188 = vadd.f32 %v186, %v187
    %v189 = vrot.slane %v188, 1
    %v190 = vadd.f32 %v188, %v189
    %v191 = vmul.f32 %v173, 0.03125
    %v192 = vmul.f32 %v190, 0.03125
    %v193 = vmul.f32 %v191, %v191
    %v194 = vsub.f32 %v192, %v193
    %v195 = vld [vmem:[%s2] sm:$0x1]
    %v196 = vadd.f32 %v194, 1e-05
    %v197 = vrsqrt.pop %v196
    %v198 = vmul.f32 %v195, %v197
    %v199 = vld [vmem:[%s2 + $0x1] sm:$0x1]
    %v200 = vmul.f32 %v191, %v198
    %v201 = vsub.f32 %v199, %v200
    %v202 = vlaneseq
    %v203 = vshrl.u32 %v202, 7
    %v204 = vsub.s32 0, %v203
    %v205 = vrot.slane %v198, %v204
    %v206 = vmul.f32 %v146, %v205
    %v207 = vmul.f32 %v149, %v205
    %v208 = vmul.f32 %v154, %v205
    %v209 = vmul.f32 %v157, %v205
    %v210 = vlaneseq
    %v211 = vshrl.u32 %v210, 7
    %v212 = vsub.s32 0, %v211
    %v213 = vrot.slane %v201, %v212
    %v214 = vadd.f32 %v206, %v213
    %v215 = vadd.f32 %v207, %v213
    %v216 = vadd.f32 %v208, %v213
    %v217 = vadd.f32 %v209, %v213
    %vm218 = vcmp.gt.f32.partialorder %v214, 0.0
    %vm219 = vcmp.gt.f32.partialorder %v215, 0.0
    %vm220 = vcmp.gt.f32.partialorder %v216, 0.0
    %vm221 = vcmp.gt.f32.partialorder %v217, 0.0
    %v222 = vmul.f32 %v214, 0.2
    %v223 = vmul.f32 %v215, 0.2
    %v224 = vmul.f32 %v216, 0.2
    %v225 = vmul.f32 %v217, 0.2
    %v226 = vsel %vm218, %v214, %v222
    %v227 = vsel %vm219, %v215, %v223
    %v228 = vsel %vm220, %v216, %v224
    %v229 = vsel %vm221, %v217, %v225
    %v230 = vpack.c.bf16 %v227, %v226
    %v231 = vpack.c.bf16 %v229, %v228
    %v232 = vld [vmem:[%s3] sm:$0xf]
    %v233 = vld [vmem:[%s3 + $0x4] sm:$0xf]
    %v234 = vld [vmem:[%s3 + $0x8] sm:$0xf]
    %v235 = vld [vmem:[%s3 + $0xc] sm:$0xf]
    %v236 = vld [vmem:[%s3 + $0x10] sm:$0xf]
    %v237 = vld [vmem:[%s3 + $0x14] sm:$0xf]
    %v238 = vld [vmem:[%s3 + $0x18] sm:$0xf]
    %v239 = vld [vmem:[%s3 + $0x1c] sm:$0xf]
    %v248 = vunpack.c.l.b16 %v232
    %v249 = vunpack.c.l.b16 %v233
    %v250 = vunpack.c.l.b16 %v234
    %v251 = vunpack.c.l.b16 %v235
    %v252 = vunpack.c.l.b16 %v236
    %v253 = vunpack.c.l.b16 %v237
    %v254 = vunpack.c.l.b16 %v238
    %v255 = vunpack.c.l.b16 %v239
    %v256 = vpack.c.b16 %v249, %v248
    %v257 = vpack.c.b16 %v251, %v250
    %v258 = vpack.c.b16 %v253, %v252
    %v259 = vpack.c.b16 %v255, %v254
    %v265 = vsel %vm160, %v230, 0
    %v268 = vsel %vm160, %v231, 0
    %270 = vmatprep.subr.bf16.mxu0 0
    %271 = vmatpush1.bf16.msra.mxu0 %v256
    %272 = vmatprep.subr.bf16.mxu0 0
    %273 = vmatpush1.bf16.msra.mxu0 %v257
    %274 = vmatprep.subr.bf16.mxu0 0
    %275 = vmatpush1.bf16.msra.mxu0 %v258
    %276 = vmatprep.subr.bf16.mxu0 0
    %277 = vmatpush1.bf16.msra.mxu0 %v259
    %278 = vmatprep.subr.bf16.mxu0 0
    %279 = vmatpush1.bf16.msra.mxu0 0
    %280 = vmatprep.subr.bf16.mxu0 0
    %281 = vmatpush1.bf16.msra.mxu0 0
    %282 = vmatprep.subr.bf16.mxu0 0
    %283 = vmatpush1.bf16.msra.mxu0 0
    %284 = vmatprep.subr.bf16.mxu0 0
    %285 = vmatpush1.bf16.msra.mxu0 0
    %286 = vmatprep.subr.bf16.mxu0 0
    %287 = vmatpush1.bf16.msra.mxu0 0
    %288 = vmatprep.subr.bf16.mxu0 0
    %289 = vmatpush1.bf16.msra.mxu0 0
    %290 = vmatprep.subr.bf16.mxu0 0
    %291 = vmatpush1.bf16.msra.mxu0 0
    %292 = vmatprep.subr.bf16.mxu0 0
    %293 = vmatpush1.bf16.msra.mxu0 0
    %294 = vmatprep.subr.bf16.mxu0 0
    %295 = vmatpush1.bf16.msra.mxu0 0
    %296 = vmatprep.subr.bf16.mxu0 0
    %297 = vmatpush1.bf16.msra.mxu0 0
    %298 = vmatprep.subr.bf16.mxu0 0
    %299 = vmatpush1.bf16.msra.mxu0 0
    %300 = vmatprep.subr.bf16.mxu0 0
    %301 = vmatpush1.bf16.msra.mxu0 0
    %302 = vmatprep.mubr.bf16.mxu0 0
    %303 = vmatmul.mubr.bf16.gmra.mrb[0].mxu0 %v265
    %v304 = vpop.f32.mrb[0].mxu0
    %v305 = vadd.f32 0.0, %v304
    %v306 = vpop.f32.mrb[0].mxu0
    %v307 = vpop.f32.mrb[0].mxu0
    %v308 = vadd.f32 0.0, %v307
    %v309 = vpop.f32.mrb[0].mxu0
    %310 = vmatprep.mubr.bf16.mxu0 0
    %311 = vmatmul.mubr.bf16.gmra.mrb[0].mxu0 %v268
    %v312 = vpop.f32.mrb[0].mxu0
    %v313 = vadd.f32 0.0, %v312
    %v314 = vpop.f32.mrb[0].mxu0
    %v315 = vpop.f32.mrb[0].mxu0
    %v316 = vadd.f32 0.0, %v315
    %v317 = vpop.f32.mrb[0].mxu0
    %318 = vdwg.mxu0
    %v319 = vadd.f32 %v305, %v308
    %v320 = vadd.f32 %v319, %v313
    %v321 = vadd.f32 %v320, %v316
    %v322 = vrot.slane %v321, 4
    %v323 = vadd.f32 %v321, %v322
    %v324 = vrot.slane %v323, 2
    %v325 = vadd.f32 %v323, %v324
    %v326 = vrot.slane %v325, 1
    %v327 = vadd.f32 %v325, %v326
    %v328 = vmul.f32 %v305, %v305
    %v329 = vmul.f32 %v308, %v308
    %v330 = vmul.f32 %v313, %v313
    %v331 = vmul.f32 %v316, %v316
    %v332 = vadd.f32 %v328, %v329
    %v333 = vadd.f32 %v332, %v330
    %v334 = vadd.f32 %v333, %v331
    %v335 = vrot.slane %v334, 4
    %v336 = vadd.f32 %v334, %v335
    %v337 = vrot.slane %v336, 2
    %v338 = vadd.f32 %v336, %v337
    %v339 = vrot.slane %v338, 1
    %v340 = vadd.f32 %v338, %v339
    %v341 = vmul.f32 %v327, 0.03125
    %v342 = vmul.f32 %v340, 0.03125
    %v343 = vmul.f32 %v341, %v341
    %v344 = vsub.f32 %v342, %v343
    %v345 = vld [vmem:[%s4] sm:$0x1]
    %v346 = vadd.f32 %v344, 1e-05
    %v347 = vrsqrt.pop %v346
    %v348 = vmul.f32 %v345, %v347
    %v349 = vld [vmem:[%s4 + $0x1] sm:$0x1]
    %v350 = vmul.f32 %v341, %v348
    %v351 = vsub.f32 %v349, %v350
    %v352 = vlaneseq
    %v353 = vshrl.u32 %v352, 7
    %v354 = vsub.s32 0, %v353
    %v355 = vrot.slane %v348, %v354
    %v356 = vmul.f32 %v305, %v355
    %v357 = vmul.f32 %v308, %v355
    %v358 = vmul.f32 %v313, %v355
    %v359 = vmul.f32 %v316, %v355
    %v360 = vlaneseq
    %v361 = vshrl.u32 %v360, 7
    %v362 = vsub.s32 0, %v361
    %v363 = vrot.slane %v351, %v362
    %v364 = vadd.f32 %v356, %v363
    %v365 = vadd.f32 %v357, %v363
    %v366 = vadd.f32 %v358, %v363
    %v367 = vadd.f32 %v359, %v363
    %vm368 = vcmp.gt.f32.partialorder %v364, 0.0
    %vm369 = vcmp.gt.f32.partialorder %v365, 0.0
    %vm370 = vcmp.gt.f32.partialorder %v366, 0.0
    %vm371 = vcmp.gt.f32.partialorder %v367, 0.0
    %v372 = vmul.f32 %v364, 0.2
    %v373 = vmul.f32 %v365, 0.2
    %v374 = vmul.f32 %v366, 0.2
    %v375 = vmul.f32 %v367, 0.2
    %v376 = vsel %vm368, %v364, %v372
    %v377 = vsel %vm369, %v365, %v373
    %v378 = vsel %vm370, %v366, %v374
    %v379 = vsel %vm371, %v367, %v375
    %v380 = vpack.c.bf16 %v377, %v376
    %v381 = vpack.c.bf16 %v379, %v378
    %v382 = vld [vmem:[#allocation5] sm:$0xff]
    %v383 = vld [vmem:[#allocation5 + $0x8] sm:$0xff]
    %v384 = vld [vmem:[#allocation5 + $0x10] sm:$0xff]
    %v385 = vld [vmem:[#allocation5 + $0x18] sm:$0xff]
    %v386 = vld [vmem:[#allocation5 + $0x20] sm:$0xff]
    %v387 = vld [vmem:[#allocation5 + $0x28] sm:$0xff]
    %v388 = vld [vmem:[#allocation5 + $0x30] sm:$0xff]
    %v389 = vld [vmem:[#allocation5 + $0x38] sm:$0xff]
    %v390 = vld [vmem:[#allocation5 + $0x40] sm:$0xff]
    %v391 = vld [vmem:[#allocation5 + $0x48] sm:$0xff]
    %v392 = vld [vmem:[#allocation5 + $0x50] sm:$0xff]
    %v393 = vld [vmem:[#allocation5 + $0x58] sm:$0xff]
    %v394 = vld [vmem:[#allocation5 + $0x60] sm:$0xff]
    %v395 = vld [vmem:[#allocation5 + $0x68] sm:$0xff]
    %v396 = vld [vmem:[#allocation5 + $0x70] sm:$0xff]
    %v397 = vld [vmem:[#allocation5 + $0x78] sm:$0xff]
    %v398 = vld [vmem:[#allocation5 + $0x80] sm:$0xff]
    %v399 = vld [vmem:[#allocation5 + $0x88] sm:$0xff]
    %v400 = vld [vmem:[#allocation5 + $0x90] sm:$0xff]
    %v401 = vld [vmem:[#allocation5 + $0x98] sm:$0xff]
    %v402 = vld [vmem:[#allocation5 + $0xa0] sm:$0xff]
    %v403 = vld [vmem:[#allocation5 + $0xa8] sm:$0xff]
    %v404 = vld [vmem:[#allocation5 + $0xb0] sm:$0xff]
    %v405 = vld [vmem:[#allocation5 + $0xb8] sm:$0xff]
    %v406 = vld [vmem:[#allocation5 + $0xc0] sm:$0xff]
    %v407 = vld [vmem:[#allocation5 + $0xc8] sm:$0xff]
    %v408 = vld [vmem:[#allocation5 + $0xd0] sm:$0xff]
    %v409 = vld [vmem:[#allocation5 + $0xd8] sm:$0xff]
    %v410 = vld [vmem:[#allocation5 + $0xe0] sm:$0xff]
    %v411 = vld [vmem:[#allocation5 + $0xe8] sm:$0xff]
    %v412 = vld [vmem:[#allocation5 + $0xf0] sm:$0xff]
    %v413 = vld [vmem:[#allocation5 + $0xf8] sm:$0xff]
    %v414 = vld [vmem:[#allocation5 + $0x100] sm:$0xff]
    %v415 = vld [vmem:[#allocation5 + $0x108] sm:$0xff]
    %v416 = vld [vmem:[#allocation5 + $0x110] sm:$0xff]
    %v417 = vld [vmem:[#allocation5 + $0x118] sm:$0xff]
    %v418 = vld [vmem:[#allocation5 + $0x120] sm:$0xff]
    %v419 = vld [vmem:[#allocation5 + $0x128] sm:$0xff]
    %v420 = vld [vmem:[#allocation5 + $0x130] sm:$0xff]
    %v421 = vld [vmem:[#allocation5 + $0x138] sm:$0xff]
    %v422 = vld [vmem:[#allocation5 + $0x140] sm:$0xff]
    %v423 = vld [vmem:[#allocation5 + $0x148] sm:$0xff]
    %v424 = vld [vmem:[#allocation5 + $0x150] sm:$0xff]
    %v425 = vld [vmem:[#allocation5 + $0x158] sm:$0xff]
    %v426 = vld [vmem:[#allocation5 + $0x160] sm:$0xff]
    %v427 = vld [vmem:[#allocation5 + $0x168] sm:$0xff]
    %v428 = vld [vmem:[#allocation5 + $0x170] sm:$0xff]
    %v429 = vld [vmem:[#allocation5 + $0x178] sm:$0xff]
    %v430 = vld [vmem:[#allocation5 + $0x180] sm:$0xff]
    %v431 = vld [vmem:[#allocation5 + $0x188] sm:$0xff]
    %v432 = vld [vmem:[#allocation5 + $0x190] sm:$0xff]
    %v433 = vld [vmem:[#allocation5 + $0x198] sm:$0xff]
    %v434 = vld [vmem:[#allocation5 + $0x1a0] sm:$0xff]
    %v435 = vld [vmem:[#allocation5 + $0x1a8] sm:$0xff]
    %v436 = vld [vmem:[#allocation5 + $0x1b0] sm:$0xff]
    %v437 = vld [vmem:[#allocation5 + $0x1b8] sm:$0xff]
    %v438 = vld [vmem:[#allocation5 + $0x1c0] sm:$0xff]
    %v439 = vld [vmem:[#allocation5 + $0x1c8] sm:$0xff]
    %v440 = vld [vmem:[#allocation5 + $0x1d0] sm:$0xff]
    %v441 = vld [vmem:[#allocation5 + $0x1d8] sm:$0xff]
    %v442 = vld [vmem:[#allocation5 + $0x1e0] sm:$0xff]
    %v443 = vld [vmem:[#allocation5 + $0x1e8] sm:$0xff]
    %v444 = vld [vmem:[#allocation5 + $0x1f0] sm:$0xff]
    %v445 = vld [vmem:[#allocation5 + $0x1f8] sm:$0xff]
    %v510 = vunpack.c.l.b16 %v382
    %v511 = vunpack.c.h.b16 %v382
    %v512 = vunpack.c.l.b16 %v383
    %v513 = vunpack.c.h.b16 %v383
    %v514 = vunpack.c.l.b16 %v384
    %v515 = vunpack.c.h.b16 %v384
    %v516 = vunpack.c.l.b16 %v385
    %v517 = vunpack.c.h.b16 %v385
    %v518 = vunpack.c.l.b16 %v386
    %v519 = vunpack.c.h.b16 %v386
    %v520 = vunpack.c.l.b16 %v387
    %v521 = vunpack.c.h.b16 %v387
    %v522 = vunpack.c.l.b16 %v388
    %v523 = vunpack.c.h.b16 %v388
    %v524 = vunpack.c.l.b16 %v389
    %v525 = vunpack.c.h.b16 %v389
    %v526 = vunpack.c.l.b16 %v390
    %v527 = vunpack.c.h.b16 %v390
    %v528 = vunpack.c.l.b16 %v391
    %v529 = vunpack.c.h.b16 %v391
    %v530 = vunpack.c.l.b16 %v392
    %v531 = vunpack.c.h.b16 %v392
    %v532 = vunpack.c.l.b16 %v393
    %v533 = vunpack.c.h.b16 %v393
    %v534 = vunpack.c.l.b16 %v394
    %v535 = vunpack.c.h.b16 %v394
    %v536 = vunpack.c.l.b16 %v395
    %v537 = vunpack.c.h.b16 %v395
    %v538 = vunpack.c.l.b16 %v396
    %v539 = vunpack.c.h.b16 %v396
    %v540 = vunpack.c.l.b16 %v397
    %v541 = vunpack.c.h.b16 %v397
    %v542 = vunpack.c.l.b16 %v398
    %v543 = vunpack.c.h.b16 %v398
    %v544 = vunpack.c.l.b16 %v399
    %v545 = vunpack.c.h.b16 %v399
    %v546 = vunpack.c.l.b16 %v400
    %v547 = vunpack.c.h.b16 %v400
    %v548 = vunpack.c.l.b16 %v401
    %v549 = vunpack.c.h.b16 %v401
    %v550 = vunpack.c.l.b16 %v402
    %v551 = vunpack.c.h.b16 %v402
    %v552 = vunpack.c.l.b16 %v403
    %v553 = vunpack.c.h.b16 %v403
    %v554 = vunpack.c.l.b16 %v404
    %v555 = vunpack.c.h.b16 %v404
    %v556 = vunpack.c.l.b16 %v405
    %v557 = vunpack.c.h.b16 %v405
    %v558 = vunpack.c.l.b16 %v406
    %v559 = vunpack.c.h.b16 %v406
    %v560 = vunpack.c.l.b16 %v407
    %v561 = vunpack.c.h.b16 %v407
    %v562 = vunpack.c.l.b16 %v408
    %v563 = vunpack.c.h.b16 %v408
    %v564 = vunpack.c.l.b16 %v409
    %v565 = vunpack.c.h.b16 %v409
    %v566 = vunpack.c.l.b16 %v410
    %v567 = vunpack.c.h.b16 %v410
    %v568 = vunpack.c.l.b16 %v411
    %v569 = vunpack.c.h.b16 %v411
    %v570 = vunpack.c.l.b16 %v412
    %v571 = vunpack.c.h.b16 %v412
    %v572 = vunpack.c.l.b16 %v413
    %v573 = vunpack.c.h.b16 %v413
    %v574 = vunpack.c.l.b16 %v414
    %v575 = vunpack.c.h.b16 %v414
    %v576 = vunpack.c.l.b16 %v415
    %v577 = vunpack.c.h.b16 %v415
    %v578 = vunpack.c.l.b16 %v416
    %v579 = vunpack.c.h.b16 %v416
    %v580 = vunpack.c.l.b16 %v417
    %v581 = vunpack.c.h.b16 %v417
    %v582 = vunpack.c.l.b16 %v418
    %v583 = vunpack.c.h.b16 %v418
    %v584 = vunpack.c.l.b16 %v419
    %v585 = vunpack.c.h.b16 %v419
    %v586 = vunpack.c.l.b16 %v420
    %v587 = vunpack.c.h.b16 %v420
    %v588 = vunpack.c.l.b16 %v421
    %v589 = vunpack.c.h.b16 %v421
    %v590 = vunpack.c.l.b16 %v422
    %v591 = vunpack.c.h.b16 %v422
    %v592 = vunpack.c.l.b16 %v423
    %v593 = vunpack.c.h.b16 %v423
    %v594 = vunpack.c.l.b16 %v424
    %v595 = vunpack.c.h.b16 %v424
    %v596 = vunpack.c.l.b16 %v425
    %v597 = vunpack.c.h.b16 %v425
    %v598 = vunpack.c.l.b16 %v426
    %v599 = vunpack.c.h.b16 %v426
    %v600 = vunpack.c.l.b16 %v427
    %v601 = vunpack.c.h.b16 %v427
    %v602 = vunpack.c.l.b16 %v428
    %v603 = vunpack.c.h.b16 %v428
    %v604 = vunpack.c.l.b16 %v429
    %v605 = vunpack.c.h.b16 %v429
    %v606 = vunpack.c.l.b16 %v430
    %v607 = vunpack.c.h.b16 %v430
    %v608 = vunpack.c.l.b16 %v431
    %v609 = vunpack.c.h.b16 %v431
    %v610 = vunpack.c.l.b16 %v432
    %v611 = vunpack.c.h.b16 %v432
    %v612 = vunpack.c.l.b16 %v433
    %v613 = vunpack.c.h.b16 %v433
    %v614 = vunpack.c.l.b16 %v434
    %v615 = vunpack.c.h.b16 %v434
    %v616 = vunpack.c.l.b16 %v435
    %v617 = vunpack.c.h.b16 %v435
    %v618 = vunpack.c.l.b16 %v436
    %v619 = vunpack.c.h.b16 %v436
    %v620 = vunpack.c.l.b16 %v437
    %v621 = vunpack.c.h.b16 %v437
    %v622 = vunpack.c.l.b16 %v438
    %v623 = vunpack.c.h.b16 %v438
    %v624 = vunpack.c.l.b16 %v439
    %v625 = vunpack.c.h.b16 %v439
    %v626 = vunpack.c.l.b16 %v440
    %v627 = vunpack.c.h.b16 %v440
    %v628 = vunpack.c.l.b16 %v441
    %v629 = vunpack.c.h.b16 %v441
    %v630 = vunpack.c.l.b16 %v442
    %v631 = vunpack.c.h.b16 %v442
    %v632 = vunpack.c.l.b16 %v443
    %v633 = vunpack.c.h.b16 %v443
    %v634 = vunpack.c.l.b16 %v444
    %v635 = vunpack.c.h.b16 %v444
    %v636 = vunpack.c.l.b16 %v445
    %v637 = vunpack.c.h.b16 %v445
    %v638 = vpack.c.b16 %v518, %v510
    %v639 = vpack.c.b16 %v519, %v511
    %v640 = vpack.c.b16 %v520, %v512
    %v641 = vpack.c.b16 %v521, %v513
    %v642 = vpack.c.b16 %v522, %v514
    %v643 = vpack.c.b16 %v523, %v515
    %v644 = vpack.c.b16 %v524, %v516
    %v645 = vpack.c.b16 %v525, %v517
    %v646 = vpack.c.b16 %v534, %v526
    %v647 = vpack.c.b16 %v535, %v527
    %v648 = vpack.c.b16 %v536, %v528
    %v649 = vpack.c.b16 %v537, %v529
    %v650 = vpack.c.b16 %v538, %v530
    %v651 = vpack.c.b16 %v539, %v531
    %v652 = vpack.c.b16 %v540, %v532
    %v653 = vpack.c.b16 %v541, %v533
    %v654 = vpack.c.b16 %v550, %v542
    %v655 = vpack.c.b16 %v551, %v543
    %v656 = vpack.c.b16 %v552, %v544
    %v657 = vpack.c.b16 %v553, %v545
    %v658 = vpack.c.b16 %v554, %v546
    %v659 = vpack.c.b16 %v555, %v547
    %v660 = vpack.c.b16 %v556, %v548
    %v661 = vpack.c.b16 %v557, %v549
    %v662 = vpack.c.b16 %v566, %v558
    %v663 = vpack.c.b16 %v567, %v559
    %v664 = vpack.c.b16 %v568, %v560
    %v665 = vpack.c.b16 %v569, %v561
    %v666 = vpack.c.b16 %v570, %v562
    %v667 = vpack.c.b16 %v571, %v563
    %v668 = vpack.c.b16 %v572, %v564
    %v669 = vpack.c.b16 %v573, %v565
    %v670 = vpack.c.b16 %v582, %v574
    %v671 = vpack.c.b16 %v583, %v575
    %v672 = vpack.c.b16 %v584, %v576
    %v673 = vpack.c.b16 %v585, %v577
    %v674 = vpack.c.b16 %v586, %v578
    %v675 = vpack.c.b16 %v587, %v579
    %v676 = vpack.c.b16 %v588, %v580
    %v677 = vpack.c.b16 %v589, %v581
    %v678 = vpack.c.b16 %v598, %v590
    %v679 = vpack.c.b16 %v599, %v591
    %v680 = vpack.c.b16 %v600, %v592
    %v681 = vpack.c.b16 %v601, %v593
    %v682 = vpack.c.b16 %v602, %v594
    %v683 = vpack.c.b16 %v603, %v595
    %v684 = vpack.c.b16 %v604, %v596
    %v685 = vpack.c.b16 %v605, %v597
    %v686 = vpack.c.b16 %v614, %v606
    %v687 = vpack.c.b16 %v615, %v607
    %v688 = vpack.c.b16 %v616, %v608
    %v689 = vpack.c.b16 %v617, %v609
    %v690 = vpack.c.b16 %v618, %v610
    %v691 = vpack.c.b16 %v619, %v611
    %v692 = vpack.c.b16 %v620, %v612
    %v693 = vpack.c.b16 %v621, %v613
    %v694 = vpack.c.b16 %v630, %v622
    %v695 = vpack.c.b16 %v631, %v623
    %v696 = vpack.c.b16 %v632, %v624
    %v697 = vpack.c.b16 %v633, %v625
    %v698 = vpack.c.b16 %v634, %v626
    %v699 = vpack.c.b16 %v635, %v627
    %v700 = vpack.c.b16 %v636, %v628
    %v701 = vpack.c.b16 %v637, %v629
    %766 = vmatprep.subr.bf16.mxu0 %v639
    %767 = vmatpush1.bf16.msra.mxu0 %v638
    %768 = vmatprep.subr.bf16.mxu0 %v647
    %769 = vmatpush1.bf16.msra.mxu0 %v646
    %770 = vmatprep.subr.bf16.mxu0 %v655
    %771 = vmatpush1.bf16.msra.mxu0 %v654
    %772 = vmatprep.subr.bf16.mxu0 %v663
    %773 = vmatpush1.bf16.msra.mxu0 %v662
    %774 = vmatprep.subr.bf16.mxu0 %v671
    %775 = vmatpush1.bf16.msra.mxu0 %v670
    %776 = vmatprep.subr.bf16.mxu0 %v679
    %777 = vmatpush1.bf16.msra.mxu0 %v678
    %778 = vmatprep.subr.bf16.mxu0 %v687
    %779 = vmatpush1.bf16.msra.mxu0 %v686
    %780 = vmatprep.subr.bf16.mxu0 %v695
    %781 = vmatpush1.bf16.msra.mxu0 %v694
    %782 = vmatprep.subr.bf16.mxu0 0
    %783 = vmatpush1.bf16.msra.mxu0 0
    %784 = vmatprep.subr.bf16.mxu0 0
    %785 = vmatpush1.bf16.msra.mxu0 0
    %786 = vmatprep.subr.bf16.mxu0 0
    %787 = vmatpush1.bf16.msra.mxu0 0
    %788 = vmatprep.subr.bf16.mxu0 0
    %789 = vmatpush1.bf16.msra.mxu0 0
    %790 = vmatprep.subr.bf16.mxu0 0
    %791 = vmatpush1.bf16.msra.mxu0 0
    %792 = vmatprep.subr.bf16.mxu0 0
    %793 = vmatpush1.bf16.msra.mxu0 0
    %794 = vmatprep.subr.bf16.mxu0 0
    %795 = vmatpush1.bf16.msra.mxu0 0
    %796 = vmatprep.subr.bf16.mxu0 0
    %797 = vmatpush1.bf16.msra.mxu0 0
    %798 = vmatprep.mubr.bf16.mxu0 0
    %799 = vmatmul.mubr.bf16.gmra.mrb[0].mxu0 %v380
    %v800 = vpop.f32.mrb[0].mxu0
    %v801 = vadd.f32 0.0, %v800
    %v802 = vpop.f32.mrb[0].mxu0
    %v803 = vadd.f32 0.0, %v802
    %v804 = vpop.f32.mrb[0].mxu0
    %v805 = vadd.f32 0.0, %v804
    %v806 = vpop.f32.mrb[0].mxu0
    %v807 = vadd.f32 0.0, %v806
    %808 = vmatprep.mubr.bf16.mxu0 0
    %809 = vmatmul.mubr.bf16.gmra.mrb[0].mxu0 %v381
    %v810 = vpop.f32.mrb[0].mxu0
    %v811 = vadd.f32 0.0, %v810
    %v812 = vpop.f32.mrb[0].mxu0
    %v813 = vadd.f32 0.0, %v812
    %v814 = vpop.f32.mrb[0].mxu0
    %v815 = vadd.f32 0.0, %v814
    %v816 = vpop.f32.mrb[0].mxu0
    %v817 = vadd.f32 0.0, %v816
    %818 = vdwg.mxu0
    %819 = vmatprep.subr.bf16.mxu0 %v641
    %820 = vmatpush1.bf16.msra.mxu0 %v640
    %821 = vmatprep.subr.bf16.mxu0 %v649
    %822 = vmatpush1.bf16.msra.mxu0 %v648
    %823 = vmatprep.subr.bf16.mxu0 %v657
    %824 = vmatpush1.bf16.msra.mxu0 %v656
    %825 = vmatprep.subr.bf16.mxu0 %v665
    %826 = vmatpush1.bf16.msra.mxu0 %v664
    %827 = vmatprep.subr.bf16.mxu0 %v673
    %828 = vmatpush1.bf16.msra.mxu0 %v672
    %829 = vmatprep.subr.bf16.mxu0 %v681
    %830 = vmatpush1.bf16.msra.mxu0 %v680
    %831 = vmatprep.subr.bf16.mxu0 %v689
    %832 = vmatpush1.bf16.msra.mxu0 %v688
    %833 = vmatprep.subr.bf16.mxu0 %v697
    %834 = vmatpush1.bf16.msra.mxu0 %v696
    %835 = vmatprep.subr.bf16.mxu0 0
    %836 = vmatpush1.bf16.msra.mxu0 0
    %837 = vmatprep.subr.bf16.mxu0 0
    %838 = vmatpush1.bf16.msra.mxu0 0
    %839 = vmatprep.subr.bf16.mxu0 0
    %840 = vmatpush1.bf16.msra.mxu0 0
    %841 = vmatprep.subr.bf16.mxu0 0
    %842 = vmatpush1.bf16.msra.mxu0 0
    %843 = vmatprep.subr.bf16.mxu0 0
    %844 = vmatpush1.bf16.msra.mxu0 0
    %845 = vmatprep.subr.bf16.mxu0 0
    %846 = vmatpush1.bf16.msra.mxu0 0
    %847 = vmatprep.subr.bf16.mxu0 0
    %848 = vmatpush1.bf16.msra.mxu0 0
    %849 = vmatprep.subr.bf16.mxu0 0
    %850 = vmatpush1.bf16.msra.mxu0 0
    %851 = vmatprep.mubr.bf16.mxu0 0
    %852 = vmatmul.mubr.bf16.gmra.mrb[0].mxu0 %v380
    %v853 = vpop.f32.mrb[0].mxu0
    %v854 = vadd.f32 0.0, %v853
    %v855 = vpop.f32.mrb[0].mxu0
    %v856 = vadd.f32 0.0, %v855
    %v857 = vpop.f32.mrb[0].mxu0
    %v858 = vadd.f32 0.0, %v857
    %v859 = vpop.f32.mrb[0].mxu0
    %v860 = vadd.f32 0.0, %v859
    %861 = vmatprep.mubr.bf16.mxu0 0
    %862 = vmatmul.mubr.bf16.gmra.mrb[0].mxu0 %v381
    %v863 = vpop.f32.mrb[0].mxu0
    %v864 = vadd.f32 0.0, %v863
    %v865 = vpop.f32.mrb[0].mxu0
    %v866 = vadd.f32 0.0, %v865
    %v867 = vpop.f32.mrb[0].mxu0
    %v868 = vadd.f32 0.0, %v867
    %v869 = vpop.f32.mrb[0].mxu0
    %v870 = vadd.f32 0.0, %v869
    %871 = vdwg.mxu0
    %872 = vmatprep.subr.bf16.mxu0 %v643
    %873 = vmatpush1.bf16.msra.mxu0 %v642
    %874 = vmatprep.subr.bf16.mxu0 %v651
    %875 = vmatpush1.bf16.msra.mxu0 %v650
    %876 = vmatprep.subr.bf16.mxu0 %v659
    %877 = vmatpush1.bf16.msra.mxu0 %v658
    %878 = vmatprep.subr.bf16.mxu0 %v667
    %879 = vmatpush1.bf16.msra.mxu0 %v666
    %880 = vmatprep.subr.bf16.mxu0 %v675
    %881 = vmatpush1.bf16.msra.mxu0 %v674
    %882 = vmatprep.subr.bf16.mxu0 %v683
    %883 = vmatpush1.bf16.msra.mxu0 %v682
    %884 = vmatprep.subr.bf16.mxu0 %v691
    %885 = vmatpush1.bf16.msra.mxu0 %v690
    %886 = vmatprep.subr.bf16.mxu0 %v699
    %887 = vmatpush1.bf16.msra.mxu0 %v698
    %888 = vmatprep.subr.bf16.mxu0 0
    %889 = vmatpush1.bf16.msra.mxu0 0
    %890 = vmatprep.subr.bf16.mxu0 0
    %891 = vmatpush1.bf16.msra.mxu0 0
    %892 = vmatprep.subr.bf16.mxu0 0
    %893 = vmatpush1.bf16.msra.mxu0 0
    %894 = vmatprep.subr.bf16.mxu0 0
    %895 = vmatpush1.bf16.msra.mxu0 0
    %896 = vmatprep.subr.bf16.mxu0 0
    %897 = vmatpush1.bf16.msra.mxu0 0
    %898 = vmatprep.subr.bf16.mxu0 0
    %899 = vmatpush1.bf16.msra.mxu0 0
    %900 = vmatprep.subr.bf16.mxu0 0
    %901 = vmatpush1.bf16.msra.mxu0 0
    %902 = vmatprep.subr.bf16.mxu0 0
    %903 = vmatpush1.bf16.msra.mxu0 0
    %904 = vmatprep.mubr.bf16.mxu0 0
    %905 = vmatmul.mubr.bf16.gmra.mrb[0].mxu0 %v380
    %v906 = vpop.f32.mrb[0].mxu0
    %v907 = vadd.f32 0.0, %v906
    %v908 = vpop.f32.mrb[0].mxu0
    %v909 = vadd.f32 0.0, %v908
    %v910 = vpop.f32.mrb[0].mxu0
    %v911 = vadd.f32 0.0, %v910
    %v912 = vpop.f32.mrb[0].mxu0
    %v913 = vadd.f32 0.0, %v912
    %914 = vmatprep.mubr.bf16.mxu0 0
    %915 = vmatmul.mubr.bf16.gmra.mrb[0].mxu0 %v381
    %v916 = vpop.f32.mrb[0].mxu0
    %v917 = vadd.f32 0.0, %v916
    %v918 = vpop.f32.mrb[0].mxu0
    %v919 = vadd.f32 0.0, %v918
    %v920 = vpop.f32.mrb[0].mxu0
    %v921 = vadd.f32 0.0, %v920
    %v922 = vpop.f32.mrb[0].mxu0
    %v923 = vadd.f32 0.0, %v922
    %924 = vdwg.mxu0
    %925 = vmatprep.subr.bf16.mxu0 %v645
    %926 = vmatpush1.bf16.msra.mxu0 %v644
    %927 = vmatprep.subr.bf16.mxu0 %v653
    %928 = vmatpush1.bf16.msra.mxu0 %v652
    %929 = vmatprep.subr.bf16.mxu0 %v661
    %930 = vmatpush1.bf16.msra.mxu0 %v660
    %931 = vmatprep.subr.bf16.mxu0 %v669
    %932 = vmatpush1.bf16.msra.mxu0 %v668
    %933 = vmatprep.subr.bf16.mxu0 %v677
    %934 = vmatpush1.bf16.msra.mxu0 %v676
    %935 = vmatprep.subr.bf16.mxu0 %v685
    %936 = vmatpush1.bf16.msra.mxu0 %v684
    %937 = vmatprep.subr.bf16.mxu0 %v693
    %938 = vmatpush1.bf16.msra.mxu0 %v692
    %939 = vmatprep.subr.bf16.mxu0 %v701
    %940 = vmatpush1.bf16.msra.mxu0 %v700
    %941 = vmatprep.subr.bf16.mxu0 0
    %942 = vmatpush1.bf16.msra.mxu0 0
    %943 = vmatprep.subr.bf16.mxu0 0
    %944 = vmatpush1.bf16.msra.mxu0 0
    %945 = vmatprep.subr.bf16.mxu0 0
    %946 = vmatpush1.bf16.msra.mxu0 0
    %947 = vmatprep.subr.bf16.mxu0 0
    %948 = vmatpush1.bf16.msra.mxu0 0
    %949 = vmatprep.subr.bf16.mxu0 0
    %950 = vmatpush1.bf16.msra.mxu0 0
    %951 = vmatprep.subr.bf16.mxu0 0
    %952 = vmatpush1.bf16.msra.mxu0 0
    %953 = vmatprep.subr.bf16.mxu0 0
    %954 = vmatpush1.bf16.msra.mxu0 0
    %955 = vmatprep.subr.bf16.mxu0 0
    %956 = vmatpush1.bf16.msra.mxu0 0
    %957 = vmatprep.mubr.bf16.mxu0 0
    %958 = vmatmul.mubr.bf16.gmra.mrb[0].mxu0 %v380
    %v959 = vpop.f32.mrb[0].mxu0
    %v960 = vadd.f32 0.0, %v959
    %v961 = vpop.f32.mrb[0].mxu0
    %v962 = vadd.f32 0.0, %v961
    %v963 = vpop.f32.mrb[0].mxu0
    %v964 = vadd.f32 0.0, %v963
    %v965 = vpop.f32.mrb[0].mxu0
    %v966 = vadd.f32 0.0, %v965
    %967 = vmatprep.mubr.bf16.mxu0 0
    %968 = vmatmul.mubr.bf16.gmra.mrb[0].mxu0 %v381
    %v969 = vpop.f32.mrb[0].mxu0
    %v970 = vadd.f32 0.0, %v969
    %v971 = vpop.f32.mrb[0].mxu0
    %v972 = vadd.f32 0.0, %v971
    %v973 = vpop.f32.mrb[0].mxu0
    %v974 = vadd.f32 0.0, %v973
    %v975 = vpop.f32.mrb[0].mxu0
    %v976 = vadd.f32 0.0, %v975
    %977 = vdwg.mxu0
    %v978 = vadd.f32 %v801, %v805
    %v979 = vadd.f32 %v978, %v811
    %v980 = vadd.f32 %v979, %v815
    %v981 = vrot.slane %v980, 4
    %v982 = vadd.f32 %v980, %v981
    %v983 = vrot.slane %v982, 2
    %v984 = vadd.f32 %v982, %v983
    %v985 = vrot.slane %v984, 1
    %v986 = vadd.f32 %v984, %v985
    %v987 = vadd.f32 %v803, %v807
    %v988 = vadd.f32 %v987, %v813
    %v989 = vadd.f32 %v988, %v817
    %v990 = vrot.slane %v989, 4
    %v991 = vadd.f32 %v989, %v990
    %v992 = vrot.slane %v991, 2
    %v993 = vadd.f32 %v991, %v992
    %v994 = vrot.slane %v993, 1
    %v995 = vadd.f32 %v993, %v994
    %v996 = vadd.f32 %v854, %v858
    %v997 = vadd.f32 %v996, %v864
    %v998 = vadd.f32 %v997, %v868
    %v999 = vrot.slane %v998, 4
    %v1000 = vadd.f32 %v998, %v999
    %v1001 = vrot.slane %v1000, 2
    %v1002 = vadd.f32 %v1000, %v1001
    %v1003 = vrot.slane %v1002, 1
    %v1004 = vadd.f32 %v1002, %v1003
    %v1005 = vadd.f32 %v856, %v860
    %v1006 = vadd.f32 %v1005, %v866
    %v1007 = vadd.f32 %v1006, %v870
    %v1008 = vrot.slane %v1007, 4
    %v1009 = vadd.f32 %v1007, %v1008
    %v1010 = vrot.slane %v1009, 2
    %v1011 = vadd.f32 %v1009, %v1010
    %v1012 = vrot.slane %v1011, 1
    %v1013 = vadd.f32 %v1011, %v1012
    %v1014 = vadd.f32 %v907, %v911
    %v1015 = vadd.f32 %v1014, %v917
    %v1016 = vadd.f32 %v1015, %v921
    %v1017 = vrot.slane %v1016, 4
    %v1018 = vadd.f32 %v1016, %v1017
    %v1019 = vrot.slane %v1018, 2
    %v1020 = vadd.f32 %v1018, %v1019
    %v1021 = vrot.slane %v1020, 1
    %v1022 = vadd.f32 %v1020, %v1021
    %v1023 = vadd.f32 %v909, %v913
    %v1024 = vadd.f32 %v1023, %v919
    %v1025 = vadd.f32 %v1024, %v923
    %v1026 = vrot.slane %v1025, 4
    %v1027 = vadd.f32 %v1025, %v1026
    %v1028 = vrot.slane %v1027, 2
    %v1029 = vadd.f32 %v1027, %v1028
    %v1030 = vrot.slane %v1029, 1
    %v1031 = vadd.f32 %v1029, %v1030
    %v1032 = vadd.f32 %v960, %v964
    %v1033 = vadd.f32 %v1032, %v970
    %v1034 = vadd.f32 %v1033, %v974
    %v1035 = vrot.slane %v1034, 4
    %v1036 = vadd.f32 %v1034, %v1035
    %v1037 = vrot.slane %v1036, 2
    %v1038 = vadd.f32 %v1036, %v1037
    %v1039 = vrot.slane %v1038, 1
    %v1040 = vadd.f32 %v1038, %v1039
    %v1041 = vadd.f32 %v962, %v966
    %v1042 = vadd.f32 %v1041, %v972
    %v1043 = vadd.f32 %v1042, %v976
    %v1044 = vrot.slane %v1043, 4
    %v1045 = vadd.f32 %v1043, %v1044
    %v1046 = vrot.slane %v1045, 2
    %v1047 = vadd.f32 %v1045, %v1046
    %v1048 = vrot.slane %v1047, 1
    %v1049 = vadd.f32 %v1047, %v1048
    %v1050 = vmul.f32 %v801, %v801
    %v1051 = vmul.f32 %v803, %v803
    %v1052 = vmul.f32 %v854, %v854
    %v1053 = vmul.f32 %v856, %v856
    %v1054 = vmul.f32 %v907, %v907
    %v1055 = vmul.f32 %v909, %v909
    %v1056 = vmul.f32 %v960, %v960
    %v1057 = vmul.f32 %v962, %v962
    %v1058 = vmul.f32 %v805, %v805
    %v1059 = vmul.f32 %v807, %v807
    %v1060 = vmul.f32 %v858, %v858
    %v1061 = vmul.f32 %v860, %v860
    %v1062 = vmul.f32 %v911, %v911
    %v1063 = vmul.f32 %v913, %v913
    %v1064 = vmul.f32 %v964, %v964
    %v1065 = vmul.f32 %v966, %v966
    %v1066 = vmul.f32 %v811, %v811
    %v1067 = vmul.f32 %v813, %v813
    %v1068 = vmul.f32 %v864, %v864
    %v1069 = vmul.f32 %v866, %v866
    %v1070 = vmul.f32 %v917, %v917
    %v1071 = vmul.f32 %v919, %v919
    %v1072 = vmul.f32 %v970, %v970
    %v1073 = vmul.f32 %v972, %v972
    %v1074 = vmul.f32 %v815, %v815
    %v1075 = vmul.f32 %v817, %v817
    %v1076 = vmul.f32 %v868, %v868
    %v1077 = vmul.f32 %v870, %v870
    %v1078 = vmul.f32 %v921, %v921
    %v1079 = vmul.f32 %v923, %v923
    %v1080 = vmul.f32 %v974, %v974
    %v1081 = vmul.f32 %v976, %v976
    %v1082 = vadd.f32 %v1050, %v1058
    %v1083 = vadd.f32 %v1082, %v1066
    %v1084 = vadd.f32 %v1083, %v1074
    %v1085 = vrot.slane %v1084, 4
    %v1086 = vadd.f32 %v1084, %v1085
    %v1087 = vrot.slane %v1086, 2
    %v1088 = vadd.f32 %v1086, %v1087
    %v1089 = vrot.slane %v1088, 1
    %v1090 = vadd.f32 %v1088, %v1089
    %v1091 = vadd.f32 %v1051, %v1059
    %v1092 = vadd.f32 %v1091, %v1067
    %v1093 = vadd.f32 %v1092, %v1075
    %v1094 = vrot.slane %v1093, 4
    %v1095 = vadd.f32 %v1093, %v1094
    %v1096 = vrot.slane %v1095, 2
    %v1097 = vadd.f32 %v1095, %v1096
    %v1098 = vrot.slane %v1097, 1
    %v1099 = vadd.f32 %v1097, %v1098
    %v1100 = vadd.f32 %v1052, %v1060
    %v1101 = vadd.f32 %v1100, %v1068
    %v1102 = vadd.f32 %v1101, %v1076
    %v1103 = vrot.slane %v1102, 4
    %v1104 = vadd.f32 %v1102, %v1103
    %v1105 = vrot.slane %v1104, 2
    %v1106 = vadd.f32 %v1104, %v1105
    %v1107 = vrot.slane %v1106, 1
    %v1108 = vadd.f32 %v1106, %v1107
    %v1109 = vadd.f32 %v1053, %v1061
    %v1110 = vadd.f32 %v1109, %v1069
    %v1111 = vadd.f32 %v1110, %v1077
    %v1112 = vrot.slane %v1111, 4
    %v1113 = vadd.f32 %v1111, %v1112
    %v1114 = vrot.slane %v1113, 2
    %v1115 = vadd.f32 %v1113, %v1114
    %v1116 = vrot.slane %v1115, 1
    %v1117 = vadd.f32 %v1115, %v1116
    %v1118 = vadd.f32 %v1054, %v1062
    %v1119 = vadd.f32 %v1118, %v1070
    %v1120 = vadd.f32 %v1119, %v1078
    %v1121 = vrot.slane %v1120, 4
    %v1122 = vadd.f32 %v1120, %v1121
    %v1123 = vrot.slane %v1122, 2
    %v1124 = vadd.f32 %v1122, %v1123
    %v1125 = vrot.slane %v1124, 1
    %v1126 = vadd.f32 %v1124, %v1125
    %v1127 = vadd.f32 %v1055, %v1063
    %v1128 = vadd.f32 %v1127, %v1071
    %v1129 = vadd.f32 %v1128, %v1079
    %v1130 = vrot.slane %v1129, 4
    %v1131 = vadd.f32 %v1129, %v1130
    %v1132 = vrot.slane %v1131, 2
    %v1133 = vadd.f32 %v1131, %v1132
    %v1134 = vrot.slane %v1133, 1
    %v1135 = vadd.f32 %v1133, %v1134
    %v1136 = vadd.f32 %v1056, %v1064
    %v1137 = vadd.f32 %v1136, %v1072
    %v1138 = vadd.f32 %v1137, %v1080
    %v1139 = vrot.slane %v1138, 4
    %v1140 = vadd.f32 %v1138, %v1139
    %v1141 = vrot.slane %v1140, 2
    %v1142 = vadd.f32 %v1140, %v1141
    %v1143 = vrot.slane %v1142, 1
    %v1144 = vadd.f32 %v1142, %v1143
    %v1145 = vadd.f32 %v1057, %v1065
    %v1146 = vadd.f32 %v1145, %v1073
    %v1147 = vadd.f32 %v1146, %v1081
    %v1148 = vrot.slane %v1147, 4
    %v1149 = vadd.f32 %v1147, %v1148
    %v1150 = vrot.slane %v1149, 2
    %v1151 = vadd.f32 %v1149, %v1150
    %v1152 = vrot.slane %v1151, 1
    %v1153 = vadd.f32 %v1151, %v1152
    %v1154 = vmul.f32 %v986, 0.03125
    %v1155 = vmul.f32 %v995, 0.03125
    %v1156 = vmul.f32 %v1004, 0.03125
    %v1157 = vmul.f32 %v1013, 0.03125
    %v1158 = vmul.f32 %v1022, 0.03125
    %v1159 = vmul.f32 %v1031, 0.03125
    %v1160 = vmul.f32 %v1040, 0.03125
    %v1161 = vmul.f32 %v1049, 0.03125
    %v1162 = vmul.f32 %v1090, 0.03125
    %v1163 = vmul.f32 %v1099, 0.03125
    %v1164 = vmul.f32 %v1108, 0.03125
    %v1165 = vmul.f32 %v1117, 0.03125
    %v1166 = vmul.f32 %v1126, 0.03125
    %v1167 = vmul.f32 %v1135, 0.03125
    %v1168 = vmul.f32 %v1144, 0.03125
    %v1169 = vmul.f32 %v1153, 0.03125
    %v1170 = vmul.f32 %v1154, %v1154
    %v1171 = vmul.f32 %v1155, %v1155
    %v1172 = vmul.f32 %v1156, %v1156
    %v1173 = vmul.f32 %v1157, %v1157
    %v1174 = vmul.f32 %v1158, %v1158
    %v1175 = vmul.f32 %v1159, %v1159
    %v1176 = vmul.f32 %v1160, %v1160
    %v1177 = vmul.f32 %v1161, %v1161
    %v1178 = vsub.f32 %v1162, %v1170
    %v1179 = vsub.f32 %v1163, %v1171
    %v1180 = vsub.f32 %v1164, %v1172
    %v1181 = vsub.f32 %v1165, %v1173
    %v1182 = vsub.f32 %v1166, %v1174
    %v1183 = vsub.f32 %v1167, %v1175
    %v1184 = vsub.f32 %v1168, %v1176
    %v1185 = vsub.f32 %v1169, %v1177
    %v1186 = vld [vmem:[%s6] ss:$2 sm:$0xff]
    %v1187 = vadd.f32 %v1178, 1e-05
    %v1188 = vadd.f32 %v1179, 1e-05
    %v1189 = vadd.f32 %v1180, 1e-05
    %v1190 = vadd.f32 %v1181, 1e-05
    %v1191 = vadd.f32 %v1182, 1e-05
    %v1192 = vadd.f32 %v1183, 1e-05
    %v1193 = vadd.f32 %v1184, 1e-05
    %v1194 = vadd.f32 %v1185, 1e-05
    %v1195 = vrsqrt.pop %v1187
    %v1196 = vrsqrt.pop %v1188
    %v1197 = vrsqrt.pop %v1189
    %v1198 = vrsqrt.pop %v1190
    %v1199 = vrsqrt.pop %v1191
    %v1200 = vrsqrt.pop %v1192
    %v1201 = vrsqrt.pop %v1193
    %v1202 = vrsqrt.pop %v1194
    %v1211 = vcombine.low %v1195, %v1196
    %v1212 = vcombine.low %v1197, %v1198
    %v1213 = vcombine.low %v1199, %v1200
    %v1214 = vcombine.low %v1201, %v1202
    %v1216 = vunpack.c.l.s4 1966171168
    %v1217 = vunpack.c.0.s8 %v1216
    %v1218 = vlaneseq
    %v1219 = vshrl.u32 %v1218, 7
    %v1220 = vsub.s32 %v1217, %v1219
    %v1221 = vrot.slane %v1211, %v1220
    %v1223 = vunpack.c.l.s4 1966171168
    %v1224 = vunpack.c.0.s8 %v1223
    %v1225 = vlaneseq
    %v1226 = vshrl.u32 %v1225, 7
    %v1227 = vsub.s32 %v1224, %v1226
    %v1228 = vrot.slane %v1212, %v1227
    %v1230 = vunpack.c.l.s4 1966171168
    %v1231 = vunpack.c.0.s8 %v1230
    %v1232 = vlaneseq
    %v1233 = vshrl.u32 %v1232, 7
    %v1234 = vsub.s32 %v1231, %v1233
    %v1235 = vrot.slane %v1213, %v1234
    %v1237 = vunpack.c.l.s4 1966171168
    %v1238 = vunpack.c.0.s8 %v1237
    %v1239 = vlaneseq
    %v1240 = vshrl.u32 %v1239, 7
    %v1241 = vsub.s32 %v1238, %v1240
    %v1242 = vrot.slane %v1214, %v1241
    %v1243 = vcombine.low %v1221, %v1228
    %v1244 = vcombine.low %v1235, %v1242
    %v1246 = vunpack.c.l.s4 1966171168
    %v1247 = vunpack.c.0.s8 %v1246
    %v1248 = vlaneseq
    %v1249 = vshrl.u32 %v1248, 7
    %v1250 = vsub.s32 %v1247, %v1249
    %v1251 = vrot.slane %v1243, %v1250
    %v1253 = vunpack.c.l.s4 1966171168
    %v1254 = vunpack.c.0.s8 %v1253
    %v1255 = vlaneseq
    %v1256 = vshrl.u32 %v1255, 7
    %v1257 = vsub.s32 %v1254, %v1256
    %v1258 = vrot.slane %v1244, %v1257
    %v1259 = vcombine.low %v1251, %v1258
    %v1261 = vmul.f32 %v1186, %v1259
    %s1262 = scalar_lea.vmem %s6, 1
    %v1263 = vld [vmem:[%s1262] ss:$2 sm:$0xff]
    %v1265 = vlaneseq
    %v1266 = vshrl.u32 %v1265, 7
    %v1267 = vsub.s32 0, %v1266
    %v1268 = vrot.slane %v1261, %v1267
    %v1269 = vlaneseq
    %v1270 = vshrl.u32 %v1269, 7
    %v1271 = vsub.s32 1, %v1270
    %v1272 = vrot.slane %v1261, %v1271
    %v1273 = vlaneseq
    %v1274 = vshrl.u32 %v1273, 7
    %v1275 = vsub.s32 2, %v1274
    %v1276 = vrot.slane %v1261, %v1275
    %v1277 = vlaneseq
    %v1278 = vshrl.u32 %v1277, 7
    %v1279 = vsub.s32 3, %v1278
    %v1280 = vrot.slane %v1261, %v1279
    %v1281 = vlaneseq
    %v1282 = vshrl.u32 %v1281, 7
    %v1283 = vsub.s32 4, %v1282
    %v1284 = vrot.slane %v1261, %v1283
    %v1285 = vlaneseq
    %v1286 = vshrl.u32 %v1285, 7
    %v1287 = vsub.s32 5, %v1286
    %v1288 = vrot.slane %v1261, %v1287
    %v1289 = vlaneseq
    %v1290 = vshrl.u32 %v1289, 7
    %v1291 = vsub.s32 6, %v1290
    %v1292 = vrot.slane %v1261, %v1291
    %v1293 = vlaneseq
    %v1294 = vshrl.u32 %v1293, 7
    %v1295 = vsub.s32 7, %v1294
    %v1296 = vrot.slane %v1261, %v1295
    %v1305 = vmul.f32 %v1154, %v1268
    %v1306 = vmul.f32 %v1155, %v1272
    %v1307 = vmul.f32 %v1156, %v1276
    %v1308 = vmul.f32 %v1157, %v1280
    %v1309 = vmul.f32 %v1158, %v1284
    %v1310 = vmul.f32 %v1159, %v1288
    %v1311 = vmul.f32 %v1160, %v1292
    %v1312 = vmul.f32 %v1161, %v1296
    %v1321 = vcombine.low %v1305, %v1306
    %v1322 = vcombine.low %v1307, %v1308
    %v1323 = vcombine.low %v1309, %v1310
    %v1324 = vcombine.low %v1311, %v1312
    %v1326 = vunpack.c.l.s4 1966171168
    %v1327 = vunpack.c.0.s8 %v1326
    %v1328 = vlaneseq
    %v1329 = vshrl.u32 %v1328, 7
    %v1330 = vsub.s32 %v1327, %v1329
    %v1331 = vrot.slane %v1321, %v1330
    %v1333 = vunpack.c.l.s4 1966171168
    %v1334 = vunpack.c.0.s8 %v1333
    %v1335 = vlaneseq
    %v1336 = vshrl.u32 %v1335, 7
    %v1337 = vsub.s32 %v1334, %v1336
    %v1338 = vrot.slane %v1322, %v1337
    %v1340 = vunpack.c.l.s4 1966171168
    %v1341 = vunpack.c.0.s8 %v1340
    %v1342 = vlaneseq
    %v1343 = vshrl.u32 %v1342, 7
    %v1344 = vsub.s32 %v1341, %v1343
    %v1345 = vrot.slane %v1323, %v1344
    %v1347 = vunpack.c.l.s4 1966171168
    %v1348 = vunpack.c.0.s8 %v1347
    %v1349 = vlaneseq
    %v1350 = vshrl.u32 %v1349, 7
    %v1351 = vsub.s32 %v1348, %v1350
    %v1352 = vrot.slane %v1324, %v1351
    %v1353 = vcombine.low %v1331, %v1338
    %v1354 = vcombine.low %v1345, %v1352
    %v1356 = vunpack.c.l.s4 1966171168
    %v1357 = vunpack.c.0.s8 %v1356
    %v1358 = vlaneseq
    %v1359 = vshrl.u32 %v1358, 7
    %v1360 = vsub.s32 %v1357, %v1359
    %v1361 = vrot.slane %v1353, %v1360
    %v1363 = vunpack.c.l.s4 1966171168
    %v1364 = vunpack.c.0.s8 %v1363
    %v1365 = vlaneseq
    %v1366 = vshrl.u32 %v1365, 7
    %v1367 = vsub.s32 %v1364, %v1366
    %v1368 = vrot.slane %v1354, %v1367
    %v1369 = vcombine.low %v1361, %v1368
    %v1371 = vsub.f32 %v1263, %v1369
    %v1372 = vmul.f32 %v801, %v1268
    %v1373 = vmul.f32 %v803, %v1272
    %v1374 = vmul.f32 %v854, %v1276
    %v1375 = vmul.f32 %v856, %v1280
    %v1376 = vmul.f32 %v907, %v1284
    %v1377 = vmul.f32 %v909, %v1288
    %v1378 = vmul.f32 %v960, %v1292
    %v1379 = vmul.f32 %v962, %v1296
    %v1380 = vmul.f32 %v805, %v1268
    %v1381 = vmul.f32 %v807, %v1272
    %v1382 = vmul.f32 %v858, %v1276
    %v1383 = vmul.f32 %v860, %v1280
    %v1384 = vmul.f32 %v911, %v1284
    %v1385 = vmul.f32 %v913, %v1288
    %v1386 = vmul.f32 %v964, %v1292
    %v1387 = vmul.f32 %v966, %v1296
    %v1388 = vmul.f32 %v811, %v1268
    %v1389 = vmul.f32 %v813, %v1272
    %v1390 = vmul.f32 %v864, %v1276
    %v1391 = vmul.f32 %v866, %v1280
    %v1392 = vmul.f32 %v917, %v1284
    %v1393 = vmul.f32 %v919, %v1288
    %v1394 = vmul.f32 %v970, %v1292
    %v1395 = vmul.f32 %v972, %v1296
    %v1396 = vmul.f32 %v815, %v1268
    %v1397 = vmul.f32 %v817, %v1272
    %v1398 = vmul.f32 %v868, %v1276
    %v1399 = vmul.f32 %v870, %v1280
    %v1400 = vmul.f32 %v921, %v1284
    %v1401 = vmul.f32 %v923, %v1288
    %v1402 = vmul.f32 %v974, %v1292
    %v1403 = vmul.f32 %v976, %v1296
    %v1405 = vlaneseq
    %v1406 = vshrl.u32 %v1405, 7
    %v1407 = vsub.s32 0, %v1406
    %v1408 = vrot.slane %v1371, %v1407
    %v1409 = vlaneseq
    %v1410 = vshrl.u32 %v1409, 7
    %v1411 = vsub.s32 1, %v1410
    %v1412 = vrot.slane %v1371, %v1411
    %v1413 = vlaneseq
    %v1414 = vshrl.u32 %v1413, 7
    %v1415 = vsub.s32 2, %v1414
    %v1416 = vrot.slane %v1371, %v1415
    %v1417 = vlaneseq
    %v1418 = vshrl.u32 %v1417, 7
    %v1419 = vsub.s32 3, %v1418
    %v1420 = vrot.slane %v1371, %v1419
    %v1421 = vlaneseq
    %v1422 = vshrl.u32 %v1421, 7
    %v1423 = vsub.s32 4, %v1422
    %v1424 = vrot.slane %v1371, %v1423
    %v1425 = vlaneseq
    %v1426 = vshrl.u32 %v1425, 7
    %v1427 = vsub.s32 5, %v1426
    %v1428 = vrot.slane %v1371, %v1427
    %v1429 = vlaneseq
    %v1430 = vshrl.u32 %v1429, 7
    %v1431 = vsub.s32 6, %v1430
    %v1432 = vrot.slane %v1371, %v1431
    %v1433 = vlaneseq
    %v1434 = vshrl.u32 %v1433, 7
    %v1435 = vsub.s32 7, %v1434
    %v1436 = vrot.slane %v1371, %v1435
    %v1445 = vadd.f32 %v1372, %v1408
    %v1446 = vadd.f32 %v1373, %v1412
    %v1447 = vadd.f32 %v1374, %v1416
    %v1448 = vadd.f32 %v1375, %v1420
    %v1449 = vadd.f32 %v1376, %v1424
    %v1450 = vadd.f32 %v1377, %v1428
    %v1451 = vadd.f32 %v1378, %v1432
    %v1452 = vadd.f32 %v1379, %v1436
    %v1453 = vadd.f32 %v1380, %v1408
    %v1454 = vadd.f32 %v1381, %v1412
    %v1455 = vadd.f32 %v1382, %v1416
    %v1456 = vadd.f32 %v1383, %v1420
    %v1457 = vadd.f32 %v1384, %v1424
    %v1458 = vadd.f32 %v1385, %v1428
    %v1459 = vadd.f32 %v1386, %v1432
    %v1460 = vadd.f32 %v1387, %v1436
    %v1461 = vadd.f32 %v1388, %v1408
    %v1462 = vadd.f32 %v1389, %v1412
    %v1463 = vadd.f32 %v1390, %v1416
    %v1464 = vadd.f32 %v1391, %v1420
    %v1465 = vadd.f32 %v1392, %v1424
    %v1466 = vadd.f32 %v1393, %v1428
    %v1467 = vadd.f32 %v1394, %v1432
    %v1468 = vadd.f32 %v1395, %v1436
    %v1469 = vadd.f32 %v1396, %v1408
    %v1470 = vadd.f32 %v1397, %v1412
    %v1471 = vadd.f32 %v1398, %v1416
    %v1472 = vadd.f32 %v1399, %v1420
    %v1473 = vadd.f32 %v1400, %v1424
    %v1474 = vadd.f32 %v1401, %v1428
    %v1475 = vadd.f32 %v1402, %v1432
    %v1476 = vadd.f32 %v1403, %v1436
    %v1477 = vmax.f32 %v1445, %v1453
    %v1478 = vrot.slane %v1477, 4
    %v1479 = vmax.f32 %v1477, %v1478
    %v1480 = vrot.slane %v1479, 2
    %v1481 = vmax.f32 %v1479, %v1480
    %v1482 = vrot.slane %v1481, 1
    %v1483 = vmax.f32 %v1481, %v1482
    %v1484 = vmax.f32 %v1446, %v1454
    %v1485 = vrot.slane %v1484, 4
    %v1486 = vmax.f32 %v1484, %v1485
    %v1487 = vrot.slane %v1486, 2
    %v1488 = vmax.f32 %v1486, %v1487
    %v1489 = vrot.slane %v1488, 1
    %v1490 = vmax.f32 %v1488, %v1489
    %v1491 = vmax.f32 %v1447, %v1455
    %v1492 = vrot.slane %v1491, 4
    %v1493 = vmax.f32 %v1491, %v1492
    %v1494 = vrot.slane %v1493, 2
    %v1495 = vmax.f32 %v1493, %v1494
    %v1496 = vrot.slane %v1495, 1
    %v1497 = vmax.f32 %v1495, %v1496
    %v1498 = vmax.f32 %v1448, %v1456
    %v1499 = vrot.slane %v1498, 4
    %v1500 = vmax.f32 %v1498, %v1499
    %v1501 = vrot.slane %v1500, 2
    %v1502 = vmax.f32 %v1500, %v1501
    %v1503 = vrot.slane %v1502, 1
    %v1504 = vmax.f32 %v1502, %v1503
    %v1505 = vmax.f32 %v1449, %v1457
    %v1506 = vrot.slane %v1505, 4
    %v1507 = vmax.f32 %v1505, %v1506
    %v1508 = vrot.slane %v1507, 2
    %v1509 = vmax.f32 %v1507, %v1508
    %v1510 = vrot.slane %v1509, 1
    %v1511 = vmax.f32 %v1509, %v1510
    %v1512 = vmax.f32 %v1450, %v1458
    %v1513 = vrot.slane %v1512, 4
    %v1514 = vmax.f32 %v1512, %v1513
    %v1515 = vrot.slane %v1514, 2
    %v1516 = vmax.f32 %v1514, %v1515
    %v1517 = vrot.slane %v1516, 1
    %v1518 = vmax.f32 %v1516, %v1517
    %v1519 = vmax.f32 %v1451, %v1459
    %v1520 = vrot.slane %v1519, 4
    %v1521 = vmax.f32 %v1519, %v1520
    %v1522 = vrot.slane %v1521, 2
    %v1523 = vmax.f32 %v1521, %v1522
    %v1524 = vrot.slane %v1523, 1
    %v1525 = vmax.f32 %v1523, %v1524
    %v1526 = vmax.f32 %v1452, %v1460
    %v1527 = vrot.slane %v1526, 4
    %v1528 = vmax.f32 %v1526, %v1527
    %v1529 = vrot.slane %v1528, 2
    %v1530 = vmax.f32 %v1528, %v1529
    %v1531 = vrot.slane %v1530, 1
    %v1532 = vmax.f32 %v1530, %v1531
    %v1533 = vmax.f32 %v1461, %v1469
    %v1534 = vrot.slane %v1533, 4
    %v1535 = vmax.f32 %v1533, %v1534
    %v1536 = vrot.slane %v1535, 2
    %v1537 = vmax.f32 %v1535, %v1536
    %v1538 = vrot.slane %v1537, 1
    %v1539 = vmax.f32 %v1537, %v1538
    %v1540 = vmax.f32 %v1462, %v1470
    %v1541 = vrot.slane %v1540, 4
    %v1542 = vmax.f32 %v1540, %v1541
    %v1543 = vrot.slane %v1542, 2
    %v1544 = vmax.f32 %v1542, %v1543
    %v1545 = vrot.slane %v1544, 1
    %v1546 = vmax.f32 %v1544, %v1545
    %v1547 = vmax.f32 %v1463, %v1471
    %v1548 = vrot.slane %v1547, 4
    %v1549 = vmax.f32 %v1547, %v1548
    %v1550 = vrot.slane %v1549, 2
    %v1551 = vmax.f32 %v1549, %v1550
    %v1552 = vrot.slane %v1551, 1
    %v1553 = vmax.f32 %v1551, %v1552
    %v1554 = vmax.f32 %v1464, %v1472
    %v1555 = vrot.slane %v1554, 4
    %v1556 = vmax.f32 %v1554, %v1555
    %v1557 = vrot.slane %v1556, 2
    %v1558 = vmax.f32 %v1556, %v1557
    %v1559 = vrot.slane %v1558, 1
    %v1560 = vmax.f32 %v1558, %v1559
    %v1561 = vmax.f32 %v1465, %v1473
    %v1562 = vrot.slane %v1561, 4
    %v1563 = vmax.f32 %v1561, %v1562
    %v1564 = vrot.slane %v1563, 2
    %v1565 = vmax.f32 %v1563, %v1564
    %v1566 = vrot.slane %v1565, 1
    %v1567 = vmax.f32 %v1565, %v1566
    %v1568 = vmax.f32 %v1466, %v1474
    %v1569 = vrot.slane %v1568, 4
    %v1570 = vmax.f32 %v1568, %v1569
    %v1571 = vrot.slane %v1570, 2
    %v1572 = vmax.f32 %v1570, %v1571
    %v1573 = vrot.slane %v1572, 1
    %v1574 = vmax.f32 %v1572, %v1573
    %v1575 = vmax.f32 %v1467, %v1475
    %v1576 = vrot.slane %v1575, 4
    %v1577 = vmax.f32 %v1575, %v1576
    %v1578 = vrot.slane %v1577, 2
    %v1579 = vmax.f32 %v1577, %v1578
    %v1580 = vrot.slane %v1579, 1
    %v1581 = vmax.f32 %v1579, %v1580
    %v1582 = vmax.f32 %v1468, %v1476
    %v1583 = vrot.slane %v1582, 4
    %v1584 = vmax.f32 %v1582, %v1583
    %v1585 = vrot.slane %v1584, 2
    %v1586 = vmax.f32 %v1584, %v1585
    %v1587 = vrot.slane %v1586, 1
    %v1588 = vmax.f32 %v1586, %v1587
    %v1589 = vpack.c.bf16 %v1483, %v1483
    %v1590 = vpack.c.bf16 %v1490, %v1490
    %v1591 = vpack.c.bf16 %v1497, %v1497
    %v1592 = vpack.c.bf16 %v1504, %v1504
    %v1593 = vpack.c.bf16 %v1511, %v1511
    %v1594 = vpack.c.bf16 %v1518, %v1518
    %v1595 = vpack.c.bf16 %v1525, %v1525
    %v1596 = vpack.c.bf16 %v1532, %v1532
    %v1597 = vpack.c.bf16 %v1539, %v1539
    %v1598 = vpack.c.bf16 %v1546, %v1546
    %v1599 = vpack.c.bf16 %v1553, %v1553
    %v1600 = vpack.c.bf16 %v1560, %v1560
    %v1601 = vpack.c.bf16 %v1567, %v1567
    %v1602 = vpack.c.bf16 %v1574, %v1574
    %v1603 = vpack.c.bf16 %v1581, %v1581
    %v1604 = vpack.c.bf16 %v1588, %v1588
    %v1605 = vld [vmem:[#allocation7] sm:$0xff]
    %v1606 = vld [vmem:[#allocation7 + $0x8] sm:$0xff]
    %v1607 = vld [vmem:[#allocation7 + $0x10] sm:$0xff]
    %v1608 = vld [vmem:[#allocation7 + $0x18] sm:$0xff]
    %v1609 = vld [vmem:[#allocation7 + $0x20] sm:$0xff]
    %v1610 = vld [vmem:[#allocation7 + $0x28] sm:$0xff]
    %v1611 = vld [vmem:[#allocation7 + $0x30] sm:$0xff]
    %v1612 = vld [vmem:[#allocation7 + $0x38] sm:$0xff]
    %v1613 = vld [vmem:[#allocation7 + $0x40] sm:$0xff]
    %v1614 = vld [vmem:[#allocation7 + $0x48] sm:$0xff]
    %v1615 = vld [vmem:[#allocation7 + $0x50] sm:$0xff]
    %v1616 = vld [vmem:[#allocation7 + $0x58] sm:$0xff]
    %v1617 = vld [vmem:[#allocation7 + $0x60] sm:$0xff]
    %v1618 = vld [vmem:[#allocation7 + $0x68] sm:$0xff]
    %v1619 = vld [vmem:[#allocation7 + $0x70] sm:$0xff]
    %v1620 = vld [vmem:[#allocation7 + $0x78] sm:$0xff]
    %v1621 = vld [vmem:[#allocation7 + $0x80] sm:$0xff]
    %v1622 = vld [vmem:[#allocation7 + $0x88] sm:$0xff]
    %v1623 = vld [vmem:[#allocation7 + $0x90] sm:$0xff]
    %v1624 = vld [vmem:[#allocation7 + $0x98] sm:$0xff]
    %v1625 = vld [vmem:[#allocation7 + $0xa0] sm:$0xff]
    %v1626 = vld [vmem:[#allocation7 + $0xa8] sm:$0xff]
    %v1627 = vld [vmem:[#allocation7 + $0xb0] sm:$0xff]
    %v1628 = vld [vmem:[#allocation7 + $0xb8] sm:$0xff]
    %v1629 = vld [vmem:[#allocation7 + $0xc0] sm:$0xff]
    %v1630 = vld [vmem:[#allocation7 + $0xc8] sm:$0xff]
    %v1631 = vld [vmem:[#allocation7 + $0xd0] sm:$0xff]
    %v1632 = vld [vmem:[#allocation7 + $0xd8] sm:$0xff]
    %v1633 = vld [vmem:[#allocation7 + $0xe0] sm:$0xff]
    %v1634 = vld [vmem:[#allocation7 + $0xe8] sm:$0xff]
    %v1635 = vld [vmem:[#allocation7 + $0xf0] sm:$0xff]
    %v1636 = vld [vmem:[#allocation7 + $0xf8] sm:$0xff]
    %v1637 = vld [vmem:[#allocation7 + $0x100] sm:$0xff]
    %v1638 = vld [vmem:[#allocation7 + $0x108] sm:$0xff]
    %v1639 = vld [vmem:[#allocation7 + $0x110] sm:$0xff]
    %v1640 = vld [vmem:[#allocation7 + $0x118] sm:$0xff]
    %v1641 = vld [vmem:[#allocation7 + $0x120] sm:$0xff]
    %v1642 = vld [vmem:[#allocation7 + $0x128] sm:$0xff]
    %v1643 = vld [vmem:[#allocation7 + $0x130] sm:$0xff]
    %v1644 = vld [vmem:[#allocation7 + $0x138] sm:$0xff]
    %v1645 = vld [vmem:[#allocation7 + $0x140] sm:$0xff]
    %v1646 = vld [vmem:[#allocation7 + $0x148] sm:$0xff]
    %v1647 = vld [vmem:[#allocation7 + $0x150] sm:$0xff]
    %v1648 = vld [vmem:[#allocation7 + $0x158] sm:$0xff]
    %v1649 = vld [vmem:[#allocation7 + $0x160] sm:$0xff]
    %v1650 = vld [vmem:[#allocation7 + $0x168] sm:$0xff]
    %v1651 = vld [vmem:[#allocation7 + $0x170] sm:$0xff]
    %v1652 = vld [vmem:[#allocation7 + $0x178] sm:$0xff]
    %v1653 = vld [vmem:[#allocation7 + $0x180] sm:$0xff]
    %v1654 = vld [vmem:[#allocation7 + $0x188] sm:$0xff]
    %v1655 = vld [vmem:[#allocation7 + $0x190] sm:$0xff]
    %v1656 = vld [vmem:[#allocation7 + $0x198] sm:$0xff]
    %v1657 = vld [vmem:[#allocation7 + $0x1a0] sm:$0xff]
    %v1658 = vld [vmem:[#allocation7 + $0x1a8] sm:$0xff]
    %v1659 = vld [vmem:[#allocation7 + $0x1b0] sm:$0xff]
    %v1660 = vld [vmem:[#allocation7 + $0x1b8] sm:$0xff]
    %v1661 = vld [vmem:[#allocation7 + $0x1c0] sm:$0xff]
    %v1662 = vld [vmem:[#allocation7 + $0x1c8] sm:$0xff]
    %v1663 = vld [vmem:[#allocation7 + $0x1d0] sm:$0xff]
    %v1664 = vld [vmem:[#allocation7 + $0x1d8] sm:$0xff]
    %v1665 = vld [vmem:[#allocation7 + $0x1e0] sm:$0xff]
    %v1666 = vld [vmem:[#allocation7 + $0x1e8] sm:$0xff]
    %v1667 = vld [vmem:[#allocation7 + $0x1f0] sm:$0xff]
    %v1668 = vld [vmem:[#allocation7 + $0x1f8] sm:$0xff]
    %v1669 = vld [vmem:[#allocation7 + $0x200] sm:$0xff]
    %v1670 = vld [vmem:[#allocation7 + $0x208] sm:$0xff]
    %v1671 = vld [vmem:[#allocation7 + $0x210] sm:$0xff]
    %v1672 = vld [vmem:[#allocation7 + $0x218] sm:$0xff]
    %v1673 = vld [vmem:[#allocation7 + $0x220] sm:$0xff]
    %v1674 = vld [vmem:[#allocation7 + $0x228] sm:$0xff]
    %v1675 = vld [vmem:[#allocation7 + $0x230] sm:$0xff]
    %v1676 = vld [vmem:[#allocation7 + $0x238] sm:$0xff]
    %v1677 = vld [vmem:[#allocation7 + $0x240] sm:$0xff]
    %v1678 = vld [vmem:[#allocation7 + $0x248] sm:$0xff]
    %v1679 = vld [vmem:[#allocation7 + $0x250] sm:$0xff]
    %v1680 = vld [vmem:[#allocation7 + $0x258] sm:$0xff]
    %v1681 = vld [vmem:[#allocation7 + $0x260] sm:$0xff]
    %v1682 = vld [vmem:[#allocation7 + $0x268] sm:$0xff]
    %v1683 = vld [vmem:[#allocation7 + $0x270] sm:$0xff]
    %v1684 = vld [vmem:[#allocation7 + $0x278] sm:$0xff]
    %v1685 = vld [vmem:[#allocation7 + $0x280] sm:$0xff]
    %v1686 = vld [vmem:[#allocation7 + $0x288] sm:$0xff]
    %v1687 = vld [vmem:[#allocation7 + $0x290] sm:$0xff]
    %v1688 = vld [vmem:[#allocation7 + $0x298] sm:$0xff]
    %v1689 = vld [vmem:[#allocation7 + $0x2a0] sm:$0xff]
    %v1690 = vld [vmem:[#allocation7 + $0x2a8] sm:$0xff]
    %v1691 = vld [vmem:[#allocation7 + $0x2b0] sm:$0xff]
    %v1692 = vld [vmem:[#allocation7 + $0x2b8] sm:$0xff]
    %v1693 = vld [vmem:[#allocation7 + $0x2c0] sm:$0xff]
    %v1694 = vld [vmem:[#allocation7 + $0x2c8] sm:$0xff]
    %v1695 = vld [vmem:[#allocation7 + $0x2d0] sm:$0xff]
    %v1696 = vld [vmem:[#allocation7 + $0x2d8] sm:$0xff]
    %v1697 = vld [vmem:[#allocation7 + $0x2e0] sm:$0xff]
    %v1698 = vld [vmem:[#allocation7 + $0x2e8] sm:$0xff]
    %v1699 = vld [vmem:[#allocation7 + $0x2f0] sm:$0xff]
    %v1700 = vld [vmem:[#allocation7 + $0x2f8] sm:$0xff]
    %v1701 = vld [vmem:[#allocation7 + $0x300] sm:$0xff]
    %v1702 = vld [vmem:[#allocation7 + $0x308] sm:$0xff]
    %v1703 = vld [vmem:[#allocation7 + $0x310] sm:$0xff]
    %v1704 = vld [vmem:[#allocation7 + $0x318] sm:$0xff]
    %v1705 = vld [vmem:[#allocation7 + $0x320] sm:$0xff]
    %v1706 = vld [vmem:[#allocation7 + $0x328] sm:$0xff]
    %v1707 = vld [vmem:[#allocation7 + $0x330] sm:$0xff]
    %v1708 = vld [vmem:[#allocation7 + $0x338] sm:$0xff]
    %v1709 = vld [vmem:[#allocation7 + $0x340] sm:$0xff]
    %v1710 = vld [vmem:[#allocation7 + $0x348] sm:$0xff]
    %v1711 = vld [vmem:[#allocation7 + $0x350] sm:$0xff]
    %v1712 = vld [vmem:[#allocation7 + $0x358] sm:$0xff]
    %v1713 = vld [vmem:[#allocation7 + $0x360] sm:$0xff]
    %v1714 = vld [vmem:[#allocation7 + $0x368] sm:$0xff]
    %v1715 = vld [vmem:[#allocation7 + $0x370] sm:$0xff]
    %v1716 = vld [vmem:[#allocation7 + $0x378] sm:$0xff]
    %v1717 = vld [vmem:[#allocation7 + $0x380] sm:$0xff]
    %v1718 = vld [vmem:[#allocation7 + $0x388] sm:$0xff]
    %v1719 = vld [vmem:[#allocation7 + $0x390] sm:$0xff]
    %v1720 = vld [vmem:[#allocation7 + $0x398] sm:$0xff]
    %v1721 = vld [vmem:[#allocation7 + $0x3a0] sm:$0xff]
    %v1722 = vld [vmem:[#allocation7 + $0x3a8] sm:$0xff]
    %v1723 = vld [vmem:[#allocation7 + $0x3b0] sm:$0xff]
    %v1724 = vld [vmem:[#allocation7 + $0x3b8] sm:$0xff]
    %v1725 = vld [vmem:[#allocation7 + $0x3c0] sm:$0xff]
    %v1726 = vld [vmem:[#allocation7 + $0x3c8] sm:$0xff]
    %v1727 = vld [vmem:[#allocation7 + $0x3d0] sm:$0xff]
    %v1728 = vld [vmem:[#allocation7 + $0x3d8] sm:$0xff]
    %v1729 = vld [vmem:[#allocation7 + $0x3e0] sm:$0xff]
    %v1730 = vld [vmem:[#allocation7 + $0x3e8] sm:$0xff]
    %v1731 = vld [vmem:[#allocation7 + $0x3f0] sm:$0xff]
    %v1732 = vld [vmem:[#allocation7 + $0x3f8] sm:$0xff]
    %v1733 = vld [vmem:[%s8] sm:$0x3]
    %v1735 = vlaneseq
    %v1736 = vshrl.u32 %v1735, 7
    %v1737 = vsub.s32 0, %v1736
    %v1738 = vrot.slane %v1733, %v1737
    %v1739 = vlaneseq
    %v1740 = vshrl.u32 %v1739, 7
    %v1741 = vsub.s32 1, %v1740
    %v1742 = vrot.slane %v1733, %v1741
    %v1761 = vunpack.c.l.b16 %v1589
    %v1762 = vunpack.c.l.b16 %v1590
    %v1763 = vunpack.c.l.b16 %v1591
    %v1764 = vunpack.c.l.b16 %v1592
    %v1765 = vunpack.c.l.b16 %v1593
    %v1766 = vunpack.c.l.b16 %v1594
    %v1767 = vunpack.c.l.b16 %v1595
    %v1768 = vunpack.c.l.b16 %v1596
    %v1769 = vunpack.c.l.b16 %v1597
    %v1770 = vunpack.c.l.b16 %v1598
    %v1771 = vunpack.c.l.b16 %v1599
    %v1772 = vunpack.c.l.b16 %v1600
    %v1773 = vunpack.c.l.b16 %v1601
    %v1774 = vunpack.c.l.b16 %v1602
    %v1775 = vunpack.c.l.b16 %v1603
    %v1776 = vunpack.c.l.b16 %v1604
    %vm1777 = vcmask 1041409
    %v1778 = vsel %vm1777, %v1769, %v1761
    %v1779 = vsel %vm1777, %v1770, %v1762
    %v1780 = vsel %vm1777, %v1771, %v1763
    %v1781 = vsel %vm1777, %v1772, %v1764
    %v1782 = vsel %vm1777, %v1773, %v1765
    %v1783 = vsel %vm1777, %v1774, %v1766
    %v1784 = vsel %vm1777, %v1775, %v1767
    %v1785 = vsel %vm1777, %v1776, %v1768
    %v1786 = vpack.c.b16 %v1778, %v1778
    %v1787 = vpack.c.b16 %v1779, %v1779
    %v1788 = vpack.c.b16 %v1780, %v1780
    %v1789 = vpack.c.b16 %v1781, %v1781
    %v1790 = vpack.c.b16 %v1782, %v1782
    %v1791 = vpack.c.b16 %v1783, %v1783
    %v1792 = vpack.c.b16 %v1784, %v1784
    %v1793 = vpack.c.b16 %v1785, %v1785
    %v1930 = vunpack.c.l.b16 %v1605
    %v1931 = vunpack.c.h.b16 %v1605
    %v1932 = vunpack.c.l.b16 %v1606
    %v1933 = vunpack.c.h.b16 %v1606
    %v1934 = vunpack.c.l.b16 %v1607
    %v1935 = vunpack.c.h.b16 %v1607
    %v1936 = vunpack.c.l.b16 %v1608
    %v1937 = vunpack.c.h.b16 %v1608
    %v1938 = vunpack.c.l.b16 %v1609
    %v1939 = vunpack.c.h.b16 %v1609
    %v1940 = vunpack.c.l.b16 %v1610
    %v1941 = vunpack.c.h.b16 %v1610
    %v1942 = vunpack.c.l.b16 %v1611
    %v1943 = vunpack.c.h.b16 %v1611
    %v1944 = vunpack.c.l.b16 %v1612
    %v1945 = vunpack.c.h.b16 %v1612
    %v1946 = vunpack.c.l.b16 %v1613
    %v1947 = vunpack.c.h.b16 %v1613
    %v1948 = vunpack.c.l.b16 %v1614
    %v1949 = vunpack.c.h.b16 %v1614
    %v1950 = vunpack.c.l.b16 %v1615
    %v1951 = vunpack.c.h.b16 %v1615
    %v1952 = vunpack.c.l.b16 %v1616
    %v1953 = vunpack.c.h.b16 %v1616
    %v1954 = vunpack.c.l.b16 %v1617
    %v1955 = vunpack.c.h.b16 %v1617
    %v1956 = vunpack.c.l.b16 %v1618
    %v1957 = vunpack.c.h.b16 %v1618
    %v1958 = vunpack.c.l.b16 %v1619
    %v1959 = vunpack.c.h.b16 %v1619
    %v1960 = vunpack.c.l.b16 %v1620
    %v1961 = vunpack.c.h.b16 %v1620
    %v1962 = vunpack.c.l.b16 %v1621
    %v1963 = vunpack.c.h.b16 %v1621
    %v1964 = vunpack.c.l.b16 %v1622
    %v1965 = vunpack.c.h.b16 %v1622
    %v1966 = vunpack.c.l.b16 %v1623
    %v1967 = vunpack.c.h.b16 %v1623
    %v1968 = vunpack.c.l.b16 %v1624
    %v1969 = vunpack.c.h.b16 %v1624
    %v1970 = vunpack.c.l.b16 %v1625
    %v1971 = vunpack.c.h.b16 %v1625
    %v1972 = vunpack.c.l.b16 %v1626
    %v1973 = vunpack.c.h.b16 %v1626
    %v1974 = vunpack.c.l.b16 %v1627
    %v1975 = vunpack.c.h.b16 %v1627
    %v1976 = vunpack.c.l.b16 %v1628
    %v1977 = vunpack.c.h.b16 %v1628
    %v1978 = vunpack.c.l.b16 %v1629
    %v1979 = vunpack.c.h.b16 %v1629
    %v1980 = vunpack.c.l.b16 %v1630
    %v1981 = vunpack.c.h.b16 %v1630
    %v1982 = vunpack.c.l.b16 %v1631
    %v1983 = vunpack.c.h.b16 %v1631
    %v1984 = vunpack.c.l.b16 %v1632
    %v1985 = vunpack.c.h.b16 %v1632
    %v1986 = vunpack.c.l.b16 %v1633
    %v1987 = vunpack.c.h.b16 %v1633
    %v1988 = vunpack.c.l.b16 %v1634
    %v1989 = vunpack.c.h.b16 %v1634
    %v1990 = vunpack.c.l.b16 %v1635
    %v1991 = vunpack.c.h.b16 %v1635
    %v1992 = vunpack.c.l.b16 %v1636
    %v1993 = vunpack.c.h.b16 %v1636
    %v1994 = vunpack.c.l.b16 %v1637
    %v1995 = vunpack.c.h.b16 %v1637
    %v1996 = vunpack.c.l.b16 %v1638
    %v1997 = vunpack.c.h.b16 %v1638
    %v1998 = vunpack.c.l.b16 %v1639
    %v1999 = vunpack.c.h.b16 %v1639
    %v2000 = vunpack.c.l.b16 %v1640
    %v2001 = vunpack.c.h.b16 %v1640
    %v2002 = vunpack.c.l.b16 %v1641
    %v2003 = vunpack.c.h.b16 %v1641
    %v2004 = vunpack.c.l.b16 %v1642
    %v2005 = vunpack.c.h.b16 %v1642
    %v2006 = vunpack.c.l.b16 %v1643
    %v2007 = vunpack.c.h.b16 %v1643
    %v2008 = vunpack.c.l.b16 %v1644
    %v2009 = vunpack.c.h.b16 %v1644
    %v2010 = vunpack.c.l.b16 %v1645
    %v2011 = vunpack.c.h.b16 %v1645
    %v2012 = vunpack.c.l.b16 %v1646
    %v2013 = vunpack.c.h.b16 %v1646
    %v2014 = vunpack.c.l.b16 %v1647
    %v2015 = vunpack.c.h.b16 %v1647
    %v2016 = vunpack.c.l.b16 %v1648
    %v2017 = vunpack.c.h.b16 %v1648
    %v2018 = vunpack.c.l.b16 %v1649
    %v2019 = vunpack.c.h.b16 %v1649
    %v2020 = vunpack.c.l.b16 %v1650
    %v2021 = vunpack.c.h.b16 %v1650
    %v2022 = vunpack.c.l.b16 %v1651
    %v2023 = vunpack.c.h.b16 %v1651
    %v2024 = vunpack.c.l.b16 %v1652
    %v2025 = vunpack.c.h.b16 %v1652
    %v2026 = vunpack.c.l.b16 %v1653
    %v2027 = vunpack.c.h.b16 %v1653
    %v2028 = vunpack.c.l.b16 %v1654
    %v2029 = vunpack.c.h.b16 %v1654
    %v2030 = vunpack.c.l.b16 %v1655
    %v2031 = vunpack.c.h.b16 %v1655
    %v2032 = vunpack.c.l.b16 %v1656
    %v2033 = vunpack.c.h.b16 %v1656
    %v2034 = vunpack.c.l.b16 %v1657
    %v2035 = vunpack.c.h.b16 %v1657
    %v2036 = vunpack.c.l.b16 %v1658
    %v2037 = vunpack.c.h.b16 %v1658
    %v2038 = vunpack.c.l.b16 %v1659
    %v2039 = vunpack.c.h.b16 %v1659
    %v2040 = vunpack.c.l.b16 %v1660
    %v2041 = vunpack.c.h.b16 %v1660
    %v2042 = vunpack.c.l.b16 %v1661
    %v2043 = vunpack.c.h.b16 %v1661
    %v2044 = vunpack.c.l.b16 %v1662
    %v2045 = vunpack.c.h.b16 %v1662
    %v2046 = vunpack.c.l.b16 %v1663
    %v2047 = vunpack.c.h.b16 %v1663
    %v2048 = vunpack.c.l.b16 %v1664
    %v2049 = vunpack.c.h.b16 %v1664
    %v2050 = vunpack.c.l.b16 %v1665
    %v2051 = vunpack.c.h.b16 %v1665
    %v2052 = vunpack.c.l.b16 %v1666
    %v2053 = vunpack.c.h.b16 %v1666
    %v2054 = vunpack.c.l.b16 %v1667
    %v2055 = vunpack.c.h.b16 %v1667
    %v2056 = vunpack.c.l.b16 %v1668
    %v2057 = vunpack.c.h.b16 %v1668
    %v2058 = vunpack.c.l.b16 %v1669
    %v2059 = vunpack.c.h.b16 %v1669
    %v2060 = vunpack.c.l.b16 %v1670
    %v2061 = vunpack.c.h.b16 %v1670
    %v2062 = vunpack.c.l.b16 %v1671
    %v2063 = vunpack.c.h.b16 %v1671
    %v2064 = vunpack.c.l.b16 %v1672
    %v2065 = vunpack.c.h.b16 %v1672
    %v2066 = vunpack.c.l.b16 %v1673
    %v2067 = vunpack.c.h.b16 %v1673
    %v2068 = vunpack.c.l.b16 %v1674
    %v2069 = vunpack.c.h.b16 %v1674
    %v2070 = vunpack.c.l.b16 %v1675
    %v2071 = vunpack.c.h.b16 %v1675
    %v2072 = vunpack.c.l.b16 %v1676
    %v2073 = vunpack.c.h.b16 %v1676
    %v2074 = vunpack.c.l.b16 %v1677
    %v2075 = vunpack.c.h.b16 %v1677
    %v2076 = vunpack.c.l.b16 %v1678
    %v2077 = vunpack.c.h.b16 %v1678
    %v2078 = vunpack.c.l.b16 %v1679
    %v2079 = vunpack.c.h.b16 %v1679
    %v2080 = vunpack.c.l.b16 %v1680
    %v2081 = vunpack.c.h.b16 %v1680
    %v2082 = vunpack.c.l.b16 %v1681
    %v2083 = vunpack.c.h.b16 %v1681
    %v2084 = vunpack.c.l.b16 %v1682
    %v2085 = vunpack.c.h.b16 %v1682
    %v2086 = vunpack.c.l.b16 %v1683
    %v2087 = vunpack.c.h.b16 %v1683
    %v2088 = vunpack.c.l.b16 %v1684
    %v2089 = vunpack.c.h.b16 %v1684
    %v2090 = vunpack.c.l.b16 %v1685
    %v2091 = vunpack.c.h.b16 %v1685
    %v2092 = vunpack.c.l.b16 %v1686
    %v2093 = vunpack.c.h.b16 %v1686
    %v2094 = vunpack.c.l.b16 %v1687
    %v2095 = vunpack.c.h.b16 %v1687
    %v2096 = vunpack.c.l.b16 %v1688
    %v2097 = vunpack.c.h.b16 %v1688
    %v2098 = vunpack.c.l.b16 %v1689
    %v2099 = vunpack.c.h.b16 %v1689
    %v2100 = vunpack.c.l.b16 %v1690
    %v2101 = vunpack.c.h.b16 %v1690
    %v2102 = vunpack.c.l.b16 %v1691
    %v2103 = vunpack.c.h.b16 %v1691
    %v2104 = vunpack.c.l.b16 %v1692
    %v2105 = vunpack.c.h.b16 %v1692
    %v2106 = vunpack.c.l.b16 %v1693
    %v2107 = vunpack.c.h.b16 %v1693
    %v2108 = vunpack.c.l.b16 %v1694
    %v2109 = vunpack.c.h.b16 %v1694
    %v2110 = vunpack.c.l.b16 %v1695
    %v2111 = vunpack.c.h.b16 %v1695
    %v2112 = vunpack.c.l.b16 %v1696
    %v2113 = vunpack.c.h.b16 %v1696
    %v2114 = vunpack.c.l.b16 %v1697
    %v2115 = vunpack.c.h.b16 %v1697
    %v2116 = vunpack.c.l.b16 %v1698
    %v2117 = vunpack.c.h.b16 %v1698
    %v2118 = vunpack.c.l.b16 %v1699
    %v2119 = vunpack.c.h.b16 %v1699
    %v2120 = vunpack.c.l.b16 %v1700
    %v2121 = vunpack.c.h.b16 %v1700
    %v2122 = vunpack.c.l.b16 %v1701
    %v2123 = vunpack.c.h.b16 %v1701
    %v2124 = vunpack.c.l.b16 %v1702
    %v2125 = vunpack.c.h.b16 %v1702
    %v2126 = vunpack.c.l.b16 %v1703
    %v2127 = vunpack.c.h.b16 %v1703
    %v2128 = vunpack.c.l.b16 %v1704
    %v2129 = vunpack.c.h.b16 %v1704
    %v2130 = vunpack.c.l.b16 %v1705
    %v2131 = vunpack.c.h.b16 %v1705
    %v2132 = vunpack.c.l.b16 %v1706
    %v2133 = vunpack.c.h.b16 %v1706
    %v2134 = vunpack.c.l.b16 %v1707
    %v2135 = vunpack.c.h.b16 %v1707
    %v2136 = vunpack.c.l.b16 %v1708
    %v2137 = vunpack.c.h.b16 %v1708
    %v2138 = vunpack.c.l.b16 %v1709
    %v2139 = vunpack.c.h.b16 %v1709
    %v2140 = vunpack.c.l.b16 %v1710
    %v2141 = vunpack.c.h.b16 %v1710
    %v2142 = vunpack.c.l.b16 %v1711
    %v2143 = vunpack.c.h.b16 %v1711
    %v2144 = vunpack.c.l.b16 %v1712
    %v2145 = vunpack.c.h.b16 %v1712
    %v2146 = vunpack.c.l.b16 %v1713
    %v2147 = vunpack.c.h.b16 %v1713
    %v2148 = vunpack.c.l.b16 %v1714
    %v2149 = vunpack.c.h.b16 %v1714
    %v2150 = vunpack.c.l.b16 %v1715
    %v2151 = vunpack.c.h.b16 %v1715
    %v2152 = vunpack.c.l.b16 %v1716
    %v2153 = vunpack.c.h.b16 %v1716
    %v2154 = vunpack.c.l.b16 %v1717
    %v2155 = vunpack.c.h.b16 %v1717
    %v2156 = vunpack.c.l.b16 %v1718
    %v2157 = vunpack.c.h.b16 %v1718
    %v2158 = vunpack.c.l.b16 %v1719
    %v2159 = vunpack.c.h.b16 %v1719
    %v2160 = vunpack.c.l.b16 %v1720
    %v2161 = vunpack.c.h.b16 %v1720
    %v2162 = vunpack.c.l.b16 %v1721
    %v2163 = vunpack.c.h.b16 %v1721
    %v2164 = vunpack.c.l.b16 %v1722
    %v2165 = vunpack.c.h.b16 %v1722
    %v2166 = vunpack.c.l.b16 %v1723
    %v2167 = vunpack.c.h.b16 %v1723
    %v2168 = vunpack.c.l.b16 %v1724
    %v2169 = vunpack.c.h.b16 %v1724
    %v2170 = vunpack.c.l.b16 %v1725
    %v2171 = vunpack.c.h.b16 %v1725
    %v2172 = vunpack.c.l.b16 %v1726
    %v2173 = vunpack.c.h.b16 %v1726
    %v2174 = vunpack.c.l.b16 %v1727
    %v2175 = vunpack.c.h.b16 %v1727
    %v2176 = vunpack.c.l.b16 %v1728
    %v2177 = vunpack.c.h.b16 %v1728
    %v2178 = vunpack.c.l.b16 %v1729
    %v2179 = vunpack.c.h.b16 %v1729
    %v2180 = vunpack.c.l.b16 %v1730
    %v2181 = vunpack.c.h.b16 %v1730
    %v2182 = vunpack.c.l.b16 %v1731
    %v2183 = vunpack.c.h.b16 %v1731
    %v2184 = vunpack.c.l.b16 %v1732
    %v2185 = vunpack.c.h.b16 %v1732
    %v2186 = vpack.c.b16 %v1932, %v1930
    %v2187 = vpack.c.b16 %v1933, %v1931
    %v2188 = vpack.c.b16 %v1936, %v1934
    %v2189 = vpack.c.b16 %v1937, %v1935
    %v2190 = vpack.c.b16 %v1940, %v1938
    %v2191 = vpack.c.b16 %v1941, %v1939
    %v2192 = vpack.c.b16 %v1944, %v1942
    %v2193 = vpack.c.b16 %v1945, %v1943
    %v2194 = vpack.c.b16 %v1948, %v1946
    %v2195 = vpack.c.b16 %v1949, %v1947
    %v2196 = vpack.c.b16 %v1952, %v1950
    %v2197 = vpack.c.b16 %v1953, %v1951
    %v2198 = vpack.c.b16 %v1956, %v1954
    %v2199 = vpack.c.b16 %v1957, %v1955
    %v2200 = vpack.c.b16 %v1960, %v1958
    %v2201 = vpack.c.b16 %v1961, %v1959
    %v2202 = vpack.c.b16 %v1964, %v1962
    %v2203 = vpack.c.b16 %v1965, %v1963
    %v2204 = vpack.c.b16 %v1968, %v1966
    %v2205 = vpack.c.b16 %v1969, %v1967
    %v2206 = vpack.c.b16 %v1972, %v1970
    %v2207 = vpack.c.b16 %v1973, %v1971
    %v2208 = vpack.c.b16 %v1976, %v1974
    %v2209 = vpack.c.b16 %v1977, %v1975
    %v2210 = vpack.c.b16 %v1980, %v1978
    %v2211 = vpack.c.b16 %v1981, %v1979
    %v2212 = vpack.c.b16 %v1984, %v1982
    %v2213 = vpack.c.b16 %v1985, %v1983
    %v2214 = vpack.c.b16 %v1988, %v1986
    %v2215 = vpack.c.b16 %v1989, %v1987
    %v2216 = vpack.c.b16 %v1992, %v1990
    %v2217 = vpack.c.b16 %v1993, %v1991
    %v2218 = vpack.c.b16 %v1996, %v1994
    %v2219 = vpack.c.b16 %v1997, %v1995
    %v2220 = vpack.c.b16 %v2000, %v1998
    %v2221 = vpack.c.b16 %v2001, %v1999
    %v2222 = vpack.c.b16 %v2004, %v2002
    %v2223 = vpack.c.b16 %v2005, %v2003
    %v2224 = vpack.c.b16 %v2008, %v2006
    %v2225 = vpack.c.b16 %v2009, %v2007
    %v2226 = vpack.c.b16 %v2012, %v2010
    %v2227 = vpack.c.b16 %v2013, %v2011
    %v2228 = vpack.c.b16 %v2016, %v2014
    %v2229 = vpack.c.b16 %v2017, %v2015
    %v2230 = vpack.c.b16 %v2020, %v2018
    %v2231 = vpack.c.b16 %v2021, %v2019
    %v2232 = vpack.c.b16 %v2024, %v2022
    %v2233 = vpack.c.b16 %v2025, %v2023
    %v2234 = vpack.c.b16 %v2028, %v2026
    %v2235 = vpack.c.b16 %v2029, %v2027
    %v2236 = vpack.c.b16 %v2032, %v2030
    %v2237 = vpack.c.b16 %v2033, %v2031
    %v2238 = vpack.c.b16 %v2036, %v2034
    %v2239 = vpack.c.b16 %v2037, %v2035
    %v2240 = vpack.c.b16 %v2040, %v2038
    %v2241 = vpack.c.b16 %v2041, %v2039
    %v2242 = vpack.c.b16 %v2044, %v2042
    %v2243 = vpack.c.b16 %v2045, %v2043
    %v2244 = vpack.c.b16 %v2048, %v2046
    %v2245 = vpack.c.b16 %v2049, %v2047
    %v2246 = vpack.c.b16 %v2052, %v2050
    %v2247 = vpack.c.b16 %v2053, %v2051
    %v2248 = vpack.c.b16 %v2056, %v2054
    %v2249 = vpack.c.b16 %v2057, %v2055
    %v2250 = vpack.c.b16 %v2060, %v2058
    %v2251 = vpack.c.b16 %v2061, %v2059
    %v2252 = vpack.c.b16 %v2064, %v2062
    %v2253 = vpack.c.b16 %v2065, %v2063
    %v2254 = vpack.c.b16 %v2068, %v2066
    %v2255 = vpack.c.b16 %v2069, %v2067
    %v2256 = vpack.c.b16 %v2072, %v2070
    %v2257 = vpack.c.b16 %v2073, %v2071
    %v2258 = vpack.c.b16 %v2076, %v2074
    %v2259 = vpack.c.b16 %v2077, %v2075
    %v2260 = vpack.c.b16 %v2080, %v2078
    %v2261 = vpack.c.b16 %v2081, %v2079
    %v2262 = vpack.c.b16 %v2084, %v2082
    %v2263 = vpack.c.b16 %v2085, %v2083
    %v2264 = vpack.c.b16 %v2088, %v2086
    %v2265 = vpack.c.b16 %v2089, %v2087
    %v2266 = vpack.c.b16 %v2092, %v2090
    %v2267 = vpack.c.b16 %v2093, %v2091
    %v2268 = vpack.c.b16 %v2096, %v2094
    %v2269 = vpack.c.b16 %v2097, %v2095
    %v2270 = vpack.c.b16 %v2100, %v2098
    %v2271 = vpack.c.b16 %v2101, %v2099
    %v2272 = vpack.c.b16 %v2104, %v2102
    %v2273 = vpack.c.b16 %v2105, %v2103
    %v2274 = vpack.c.b16 %v2108, %v2106
    %v2275 = vpack.c.b16 %v2109, %v2107
    %v2276 = vpack.c.b16 %v2112, %v2110
    %v2277 = vpack.c.b16 %v2113, %v2111
    %v2278 = vpack.c.b16 %v2116, %v2114
    %v2279 = vpack.c.b16 %v2117, %v2115
    %v2280 = vpack.c.b16 %v2120, %v2118
    %v2281 = vpack.c.b16 %v2121, %v2119
    %v2282 = vpack.c.b16 %v2124, %v2122
    %v2283 = vpack.c.b16 %v2125, %v2123
    %v2284 = vpack.c.b16 %v2128, %v2126
    %v2285 = vpack.c.b16 %v2129, %v2127
    %v2286 = vpack.c.b16 %v2132, %v2130
    %v2287 = vpack.c.b16 %v2133, %v2131
    %v2288 = vpack.c.b16 %v2136, %v2134
    %v2289 = vpack.c.b16 %v2137, %v2135
    %v2290 = vpack.c.b16 %v2140, %v2138
    %v2291 = vpack.c.b16 %v2141, %v2139
    %v2292 = vpack.c.b16 %v2144, %v2142
    %v2293 = vpack.c.b16 %v2145, %v2143
    %v2294 = vpack.c.b16 %v2148, %v2146
    %v2295 = vpack.c.b16 %v2149, %v2147
    %v2296 = vpack.c.b16 %v2152, %v2150
    %v2297 = vpack.c.b16 %v2153, %v2151
    %v2298 = vpack.c.b16 %v2156, %v2154
    %v2299 = vpack.c.b16 %v2157, %v2155
    %v2300 = vpack.c.b16 %v2160, %v2158
    %v2301 = vpack.c.b16 %v2161, %v2159
    %v2302 = vpack.c.b16 %v2164, %v2162
    %v2303 = vpack.c.b16 %v2165, %v2163
    %v2304 = vpack.c.b16 %v2168, %v2166
    %v2305 = vpack.c.b16 %v2169, %v2167
    %v2306 = vpack.c.b16 %v2172, %v2170
    %v2307 = vpack.c.b16 %v2173, %v2171
    %v2308 = vpack.c.b16 %v2176, %v2174
    %v2309 = vpack.c.b16 %v2177, %v2175
    %v2310 = vpack.c.b16 %v2180, %v2178
    %v2311 = vpack.c.b16 %v2181, %v2179
    %v2312 = vpack.c.b16 %v2184, %v2182
    %v2313 = vpack.c.b16 %v2185, %v2183
    %2442 = vmatprep.subr.bf16.mxu0 %v2187
    %2443 = vmatpush1.bf16.msra.mxu0 %v2186
    %2444 = vmatprep.subr.bf16.mxu0 %v2189
    %2445 = vmatpush1.bf16.msra.mxu0 %v2188
    %2446 = vmatprep.subr.bf16.mxu0 %v2191
    %2447 = vmatpush1.bf16.msra.mxu0 %v2190
    %2448 = vmatprep.subr.bf16.mxu0 %v2193
    %2449 = vmatpush1.bf16.msra.mxu0 %v2192
    %2450 = vmatprep.subr.bf16.mxu0 %v2195
    %2451 = vmatpush1.bf16.msra.mxu0 %v2194
    %2452 = vmatprep.subr.bf16.mxu0 %v2197
    %2453 = vmatpush1.bf16.msra.mxu0 %v2196
    %2454 = vmatprep.subr.bf16.mxu0 %v2199
    %2455 = vmatpush1.bf16.msra.mxu0 %v2198
    %2456 = vmatprep.subr.bf16.mxu0 %v2201
    %2457 = vmatpush1.bf16.msra.mxu0 %v2200
    %2458 = vmatprep.subr.bf16.mxu0 %v2203
    %2459 = vmatpush1.bf16.msra.mxu0 %v2202
    %2460 = vmatprep.subr.bf16.mxu0 %v2205
    %2461 = vmatpush1.bf16.msra.mxu0 %v2204
    %2462 = vmatprep.subr.bf16.mxu0 %v2207
    %2463 = vmatpush1.bf16.msra.mxu0 %v2206
    %2464 = vmatprep.subr.bf16.mxu0 %v2209
    %2465 = vmatpush1.bf16.msra.mxu0 %v2208
    %2466 = vmatprep.subr.bf16.mxu0 %v2211
    %2467 = vmatpush1.bf16.msra.mxu0 %v2210
    %2468 = vmatprep.subr.bf16.mxu0 %v2213
    %2469 = vmatpush1.bf16.msra.mxu0 %v2212
    %2470 = vmatprep.subr.bf16.mxu0 %v2215
    %2471 = vmatpush1.bf16.msra.mxu0 %v2214
    %2472 = vmatprep.subr.bf16.mxu0 %v2217
    %2473 = vmatpush1.bf16.msra.mxu0 %v2216
    %2474 = vmatprep.mubr.bf16.mxu0 %v1787
    %2475 = vmatmul.mubr.bf16.gmra.mrb[0].mxu0 %v1786
    %v2476 = vpop.f32.mrb[0].mxu0
    %v2477 = vadd.f32 %v1738, %v2476
    %v2478 = vpop.f32.mrb[0].mxu0
    %v2479 = vadd.f32 %v1742, %v2478
    %v2480 = vpop.f32.mrb[0].mxu0
    %v2481 = vpop.f32.mrb[0].mxu0
    %2482 = vdwg.mxu0
    %2483 = vmatprep.subr.bf16.mxu0 %v2219
    %2484 = vmatpush1.bf16.msra.mxu0 %v2218
    %2485 = vmatprep.subr.bf16.mxu0 %v2221
    %2486 = vmatpush1.bf16.msra.mxu0 %v2220
    %2487 = vmatprep.subr.bf16.mxu0 %v2223
    %2488 = vmatpush1.bf16.msra.mxu0 %v2222
    %2489 = vmatprep.subr.bf16.mxu0 %v2225
    %2490 = vmatpush1.bf16.msra.mxu0 %v2224
    %2491 = vmatprep.subr.bf16.mxu0 %v2227
    %2492 = vmatpush1.bf16.msra.mxu0 %v2226
    %2493 = vmatprep.subr.bf16.mxu0 %v2229
    %2494 = vmatpush1.bf16.msra.mxu0 %v2228
    %2495 = vmatprep.subr.bf16.mxu0 %v2231
    %2496 = vmatpush1.bf16.msra.mxu0 %v2230
    %2497 = vmatprep.subr.bf16.mxu0 %v2233
    %2498 = vmatpush1.bf16.msra.mxu0 %v2232
    %2499 = vmatprep.subr.bf16.mxu0 %v2235
    %2500 = vmatpush1.bf16.msra.mxu0 %v2234
    %2501 = vmatprep.subr.bf16.mxu0 %v2237
    %2502 = vmatpush1.bf16.msra.mxu0 %v2236
    %2503 = vmatprep.subr.bf16.mxu0 %v2239
    %2504 = vmatpush1.bf16.msra.mxu0 %v2238
    %2505 = vmatprep.subr.bf16.mxu0 %v2241
    %2506 = vmatpush1.bf16.msra.mxu0 %v2240
    %2507 = vmatprep.subr.bf16.mxu0 %v2243
    %2508 = vmatpush1.bf16.msra.mxu0 %v2242
    %2509 = vmatprep.subr.bf16.mxu0 %v2245
    %2510 = vmatpush1.bf16.msra.mxu0 %v2244
    %2511 = vmatprep.subr.bf16.mxu0 %v2247
    %2512 = vmatpush1.bf16.msra.mxu0 %v2246
    %2513 = vmatprep.subr.bf16.mxu0 %v2249
    %2514 = vmatpush1.bf16.msra.mxu0 %v2248
    %2515 = vmatprep.mubr.bf16.mxu0 %v1789
    %2516 = vmatmul.mubr.bf16.gmra.mrb[0].mxu0 %v1788
    %v2517 = vpop.f32.mrb[0].mxu0
    %v2518 = vadd.f32 %v2477, %v2517
    %v2519 = vpop.f32.mrb[0].mxu0
    %v2520 = vadd.f32 %v2479, %v2519
    %v2521 = vpop.f32.mrb[0].mxu0
    %v2522 = vpop.f32.mrb[0].mxu0
    %2523 = vdwg.mxu0
    %2524 = vmatprep.subr.bf16.mxu0 %v2251
    %2525 = vmatpush1.bf16.msra.mxu0 %v2250
    %2526 = vmatprep.subr.bf16.mxu0 %v2253
    %2527 = vmatpush1.bf16.msra.mxu0 %v2252
    %2528 = vmatprep.subr.bf16.mxu0 %v2255
    %2529 = vmatpush1.bf16.msra.mxu0 %v2254
    %2530 = vmatprep.subr.bf16.mxu0 %v2257
    %2531 = vmatpush1.bf16.msra.mxu0 %v2256
    %2532 = vmatprep.subr.bf16.mxu0 %v2259
    %2533 = vmatpush1.bf16.msra.mxu0 %v2258
    %2534 = vmatprep.subr.bf16.mxu0 %v2261
    %2535 = vmatpush1.bf16.msra.mxu0 %v2260
    %2536 = vmatprep.subr.bf16.mxu0 %v2263
    %2537 = vmatpush1.bf16.msra.mxu0 %v2262
    %2538 = vmatprep.subr.bf16.mxu0 %v2265
    %2539 = vmatpush1.bf16.msra.mxu0 %v2264
    %2540 = vmatprep.subr.bf16.mxu0 %v2267
    %2541 = vmatpush1.bf16.msra.mxu0 %v2266
    %2542 = vmatprep.subr.bf16.mxu0 %v2269
    %2543 = vmatpush1.bf16.msra.mxu0 %v2268
    %2544 = vmatprep.subr.bf16.mxu0 %v2271
    %2545 = vmatpush1.bf16.msra.mxu0 %v2270
    %2546 = vmatprep.subr.bf16.mxu0 %v2273
    %2547 = vmatpush1.bf16.msra.mxu0 %v2272
    %2548 = vmatprep.subr.bf16.mxu0 %v2275
    %2549 = vmatpush1.bf16.msra.mxu0 %v2274
    %2550 = vmatprep.subr.bf16.mxu0 %v2277
    %2551 = vmatpush1.bf16.msra.mxu0 %v2276
    %2552 = vmatprep.subr.bf16.mxu0 %v2279
    %2553 = vmatpush1.bf16.msra.mxu0 %v2278
    %2554 = vmatprep.subr.bf16.mxu0 %v2281
    %2555 = vmatpush1.bf16.msra.mxu0 %v2280
    %2556 = vmatprep.mubr.bf16.mxu0 %v1791
    %2557 = vmatmul.mubr.bf16.gmra.mrb[0].mxu0 %v1790
    %v2558 = vpop.f32.mrb[0].mxu0
    %v2559 = vadd.f32 %v2518, %v2558
    %v2560 = vpop.f32.mrb[0].mxu0
    %v2561 = vadd.f32 %v2520, %v2560
    %v2562 = vpop.f32.mrb[0].mxu0
    %v2563 = vpop.f32.mrb[0].mxu0
    %2564 = vdwg.mxu0
    %2565 = vmatprep.subr.bf16.mxu0 %v2283
    %2566 = vmatpush1.bf16.msra.mxu0 %v2282
    %2567 = vmatprep.subr.bf16.mxu0 %v2285
    %2568 = vmatpush1.bf16.msra.mxu0 %v2284
    %2569 = vmatprep.subr.bf16.mxu0 %v2287
    %2570 = vmatpush1.bf16.msra.mxu0 %v2286
    %2571 = vmatprep.subr.bf16.mxu0 %v2289
    %2572 = vmatpush1.bf16.msra.mxu0 %v2288
    %2573 = vmatprep.subr.bf16.mxu0 %v2291
    %2574 = vmatpush1.bf16.msra.mxu0 %v2290
    %2575 = vmatprep.subr.bf16.mxu0 %v2293
    %2576 = vmatpush1.bf16.msra.mxu0 %v2292
    %2577 = vmatprep.subr.bf16.mxu0 %v2295
    %2578 = vmatpush1.bf16.msra.mxu0 %v2294
    %2579 = vmatprep.subr.bf16.mxu0 %v2297
    %2580 = vmatpush1.bf16.msra.mxu0 %v2296
    %2581 = vmatprep.subr.bf16.mxu0 %v2299
    %2582 = vmatpush1.bf16.msra.mxu0 %v2298
    %2583 = vmatprep.subr.bf16.mxu0 %v2301
    %2584 = vmatpush1.bf16.msra.mxu0 %v2300
    %2585 = vmatprep.subr.bf16.mxu0 %v2303
    %2586 = vmatpush1.bf16.msra.mxu0 %v2302
    %2587 = vmatprep.subr.bf16.mxu0 %v2305
    %2588 = vmatpush1.bf16.msra.mxu0 %v2304
    %2589 = vmatprep.subr.bf16.mxu0 %v2307
    %2590 = vmatpush1.bf16.msra.mxu0 %v2306
    %2591 = vmatprep.subr.bf16.mxu0 %v2309
    %2592 = vmatpush1.bf16.msra.mxu0 %v2308
    %2593 = vmatprep.subr.bf16.mxu0 %v2311
    %2594 = vmatpush1.bf16.msra.mxu0 %v2310
    %2595 = vmatprep.subr.bf16.mxu0 %v2313
    %2596 = vmatpush1.bf16.msra.mxu0 %v2312
    %2597 = vmatprep.mubr.bf16.mxu0 %v1793
    %2598 = vmatmul.mubr.bf16.gmra.mrb[0].mxu0 %v1792
    %v2599 = vpop.f32.mrb[0].mxu0
    %v2600 = vadd.f32 %v2559, %v2599
    %v2601 = vpop.f32.mrb[0].mxu0
    %v2602 = vadd.f32 %v2561, %v2601
    %v2603 = vpop.f32.mrb[0].mxu0
    %v2604 = vpop.f32.mrb[0].mxu0
    %2605 = vdwg.mxu0
    %vm2606 = vcmp.gt.f32.partialorder %v2600, 0.0
    %vm2607 = vcmp.gt.f32.partialorder %v2602, 0.0
    %v2608 = vmul.f32 %v2600, 0.2
    %v2609 = vmul.f32 %v2602, 0.2
    %v2610 = vsel %vm2606, %v2600, %v2608
    %v2611 = vsel %vm2607, %v2602, %v2609
    %v2612 = vpack.c.bf16 %v2610, %v2610
    %v2613 = vpack.c.bf16 %v2611, %v2611
    %v2614 = vld [vmem:[#allocation8] sm:$0xf]
    %v2615 = vld [vmem:[#allocation8 + $0x4] sm:$0xf]
    %v2616 = vld [vmem:[#allocation8 + $0x8] sm:$0xf]
    %v2617 = vld [vmem:[#allocation8 + $0xc] sm:$0xf]
    %v2618 = vld [vmem:[#allocation8 + $0x10] sm:$0xf]
    %v2619 = vld [vmem:[#allocation8 + $0x14] sm:$0xf]
    %v2620 = vld [vmem:[#allocation8 + $0x18] sm:$0xf]
    %v2621 = vld [vmem:[#allocation8 + $0x1c] sm:$0xf]
    %v2622 = vld [vmem:[#allocation8 + $0x20] sm:$0xf]
    %v2623 = vld [vmem:[#allocation8 + $0x24] sm:$0xf]
    %v2624 = vld [vmem:[#allocation8 + $0x28] sm:$0xf]
    %v2625 = vld [vmem:[#allocation8 + $0x2c] sm:$0xf]
    %v2626 = vld [vmem:[#allocation8 + $0x30] sm:$0xf]
    %v2627 = vld [vmem:[#allocation8 + $0x34] sm:$0xf]
    %v2628 = vld [vmem:[#allocation8 + $0x38] sm:$0xf]
    %v2629 = vld [vmem:[#allocation8 + $0x3c] sm:$0xf]
    %v2630 = vld [vmem:[#allocation8 + $0x40] sm:$0xf]
    %v2631 = vld [vmem:[#allocation8 + $0x44] sm:$0xf]
    %v2632 = vld [vmem:[#allocation8 + $0x48] sm:$0xf]
    %v2633 = vld [vmem:[#allocation8 + $0x4c] sm:$0xf]
    %v2634 = vld [vmem:[#allocation8 + $0x50] sm:$0xf]
    %v2635 = vld [vmem:[#allocation8 + $0x54] sm:$0xf]
    %v2636 = vld [vmem:[#allocation8 + $0x58] sm:$0xf]
    %v2637 = vld [vmem:[#allocation8 + $0x5c] sm:$0xf]
    %v2638 = vld [vmem:[#allocation8 + $0x60] sm:$0xf]
    %v2639 = vld [vmem:[#allocation8 + $0x64] sm:$0xf]
    %v2640 = vld [vmem:[#allocation8 + $0x68] sm:$0xf]
    %v2641 = vld [vmem:[#allocation8 + $0x6c] sm:$0xf]
    %v2642 = vld [vmem:[#allocation8 + $0x70] sm:$0xf]
    %v2643 = vld [vmem:[#allocation8 + $0x74] sm:$0xf]
    %v2644 = vld [vmem:[#allocation8 + $0x78] sm:$0xf]
    %v2645 = vld [vmem:[#allocation8 + $0x7c] sm:$0xf]
    %v2646 = vld [vmem:[%s10] sm:$0x1]
    %v2648 = vlaneseq
    %v2649 = vshrl.u32 %v2648, 7
    %v2650 = vsub.s32 0, %v2649
    %v2651 = vrot.slane %v2646, %v2650
    %v2685 = vunpack.c.l.b16 %v2614
    %v2686 = vunpack.c.l.b16 %v2615
    %v2687 = vunpack.c.l.b16 %v2616
    %v2688 = vunpack.c.l.b16 %v2617
    %v2689 = vunpack.c.l.b16 %v2618
    %v2690 = vunpack.c.l.b16 %v2619
    %v2691 = vunpack.c.l.b16 %v2620
    %v2692 = vunpack.c.l.b16 %v2621
    %v2693 = vunpack.c.l.b16 %v2622
    %v2694 = vunpack.c.l.b16 %v2623
    %v2695 = vunpack.c.l.b16 %v2624
    %v2696 = vunpack.c.l.b16 %v2625
    %v2697 = vunpack.c.l.b16 %v2626
    %v2698 = vunpack.c.l.b16 %v2627
    %v2699 = vunpack.c.l.b16 %v2628
    %v2700 = vunpack.c.l.b16 %v2629
    %v2701 = vunpack.c.l.b16 %v2630
    %v2702 = vunpack.c.l.b16 %v2631
    %v2703 = vunpack.c.l.b16 %v2632
    %v2704 = vunpack.c.l.b16 %v2633
    %v2705 = vunpack.c.l.b16 %v2634
    %v2706 = vunpack.c.l.b16 %v2635
    %v2707 = vunpack.c.l.b16 %v2636
    %v2708 = vunpack.c.l.b16 %v2637
    %v2709 = vunpack.c.l.b16 %v2638
    %v2710 = vunpack.c.l.b16 %v2639
    %v2711 = vunpack.c.l.b16 %v2640
    %v2712 = vunpack.c.l.b16 %v2641
    %v2713 = vunpack.c.l.b16 %v2642
    %v2714 = vunpack.c.l.b16 %v2643
    %v2715 = vunpack.c.l.b16 %v2644
    %v2716 = vunpack.c.l.b16 %v2645
    %v2717 = vpack.c.b16 %v2686, %v2685
    %v2718 = vpack.c.b16 %v2688, %v2687
    %v2719 = vpack.c.b16 %v2690, %v2689
    %v2720 = vpack.c.b16 %v2692, %v2691
    %v2721 = vpack.c.b16 %v2694, %v2693
    %v2722 = vpack.c.b16 %v2696, %v2695
    %v2723 = vpack.c.b16 %v2698, %v2697
    %v2724 = vpack.c.b16 %v2700, %v2699
    %v2725 = vpack.c.b16 %v2702, %v2701
    %v2726 = vpack.c.b16 %v2704, %v2703
    %v2727 = vpack.c.b16 %v2706, %v2705
    %v2728 = vpack.c.b16 %v2708, %v2707
    %v2729 = vpack.c.b16 %v2710, %v2709
    %v2730 = vpack.c.b16 %v2712, %v2711
    %v2731 = vpack.c.b16 %v2714, %v2713
    %v2732 = vpack.c.b16 %v2716, %v2715
    %2749 = vmatprep.subr.bf16.mxu0 0
    %2750 = vmatpush1.bf16.msra.mxu0 %v2717
    %2751 = vmatprep.subr.bf16.mxu0 0
    %2752 = vmatpush1.bf16.msra.mxu0 %v2718
    %2753 = vmatprep.subr.bf16.mxu0 0
    %2754 = vmatpush1.bf16.msra.mxu0 %v2719
    %2755 = vmatprep.subr.bf16.mxu0 0
    %2756 = vmatpush1.bf16.msra.mxu0 %v2720
    %2757 = vmatprep.subr.bf16.mxu0 0
    %2758 = vmatpush1.bf16.msra.mxu0 %v2721
    %2759 = vmatprep.subr.bf16.mxu0 0
    %2760 = vmatpush1.bf16.msra.mxu0 %v2722
    %2761 = vmatprep.subr.bf16.mxu0 0
    %2762 = vmatpush1.bf16.msra.mxu0 %v2723
    %2763 = vmatprep.subr.bf16.mxu0 0
    %2764 = vmatpush1.bf16.msra.mxu0 %v2724
    %2765 = vmatprep.subr.bf16.mxu0 0
    %2766 = vmatpush1.bf16.msra.mxu0 %v2725
    %2767 = vmatprep.subr.bf16.mxu0 0
    %2768 = vmatpush1.bf16.msra.mxu0 %v2726
    %2769 = vmatprep.subr.bf16.mxu0 0
    %2770 = vmatpush1.bf16.msra.mxu0 %v2727
    %2771 = vmatprep.subr.bf16.mxu0 0
    %2772 = vmatpush1.bf16.msra.mxu0 %v2728
    %2773 = vmatprep.subr.bf16.mxu0 0
    %2774 = vmatpush1.bf16.msra.mxu0 %v2729
    %2775 = vmatprep.subr.bf16.mxu0 0
    %2776 = vmatpush1.bf16.msra.mxu0 %v2730
    %2777 = vmatprep.subr.bf16.mxu0 0
    %2778 = vmatpush1.bf16.msra.mxu0 %v2731
    %2779 = vmatprep.subr.bf16.mxu0 0
    %2780 = vmatpush1.bf16.msra.mxu0 %v2732
    %2781 = vmatprep.mubr.bf16.mxu0 %v2613
    %2782 = vmatmul.mubr.bf16.gmra.mrb[0].mxu0 %v2612
    %v2783 = vpop.f32.mrb[0].mxu0
    %v2784 = vadd.f32 %v2651, %v2783
    %v2785 = vpop.f32.mrb[0].mxu0
    %v2786 = vpop.f32.mrb[0].mxu0
    %v2787 = vpop.f32.mrb[0].mxu0
    %2788 = vdwg.mxu0
    %2789 = vst [vmem:[#allocation10] sm:$0x3] %v2784
    // Predicated region
    $region62: #{tpu_custom_call.1} parent=1 // pred_check
      _
    $region63: #{tpu_custom_call.1} parent=1 // pred_check_branch
      %2791 = sbr.rel (0) target = $region65
    $region64: #{tpu_custom_call.1} parent=1 // pred_region
      %s2793 = ssub.s32 32, 32
      %2794 = vsyncadd [#allocation4], %s2793
      %s2796 = sshll.u32 [#allocation10], 4
      %s2797 = int_to_ptr.vmem [resolvable:$true] %s2796
      %2799 = dma.vmem_to_hbm [thread:$0]  %s2797, 32, %s11, [#allocation4]
    $region65: #{tpu_custom_call.1} parent=1 // pred_fallthru
      _
    // Predicated region
    $region66: #{tpu_custom_call.1} parent=1 // pred_check
      _
    $region67: #{tpu_custom_call.1} parent=1 // pred_check_branch
      %2801 = sbr.rel (0) target = $region69
    $region68: #{tpu_custom_call.1} parent=1 // pred_region
      %2802 = dma.done [#allocation4], 32
    $region69: #{tpu_custom_call.1} parent=1 // pred_fallthru
      _
    %2803 = vsyncpa [#allocation3], 1
    %2804 = vsyncpa [#allocation6], 1
    %2805 = vsyncpa [#allocation9], 1
    %2806 = vsyncpa [#allocation4], 1

</llo_original>
